<compile_context>
chip_gen: v5e
topology: v5e:2x2
jax: 0.10.0
libtpu: 0.0.40
codegen_flags: <defaults>
</compile_context>

<pallas_src>
import functools

import jax
import jax.numpy as jnp
import numpy as np
from jax.experimental import pallas as pl
from jax.experimental.pallas import tpu as pltpu

_LANE = 128  # TPU vreg lane width; batch tiles are multiples of this.


# ------------------------------ Pallas kernels --------------------------------
def gram_kernel(t_ref, alpha_ref, x_ref, g_ref, rhs_ref):
    """Fused basis generation + normal-equation assembly for one batch tile.

    Batch-on-lanes layout: alpha (K, tb), x (m, tb), t (m, 1).
      g[k, l, b]  = sum_i Phi[k,i,b] * Phi[l,i,b]
      rhs[k, b]   = sum_i Phi[k,i,b] * x[i,b]
    with Phi[k, i, b] = exp(-alpha[k, b] * t[i]) generated on the fly (EUP).
    """
    t = t_ref[...]            # (m, 1)
    alpha = alpha_ref[...]    # (K, tb)
    x = x_ref[...]            # (m, tb)
    K = alpha.shape[0]

    phi = jnp.exp(-alpha[:, None, :] * t[None, :, :])         # (K, m, tb)  EUP
    # rhs_k = <Phi_k, x>: m-reduction = VPU adds over sublane rows + one sublane reduce
    rhs_ref[...] = jnp.sum(phi * x[None, :, :], axis=1)       # (K, tb)
    # Gram rows: G[k, :, :] = <Phi_l, Phi_k> for all l (symmetric)
    for k in range(K):
        g_ref[k] = jnp.sum(phi * phi[k][None, :, :], axis=1)  # (K, tb)


def update_kernel(t_ref, alpha_ref, x_ref, c_ref, o_ref, *, delta):
    """One VP iteration: alpha_next = alpha + delta * clip_norm(resid @ J) (Kaufman J).

    Phi is regenerated from alpha; dPhi = -t * Phi is folded analytically, so
      grad[k, b] = -sum_i c[k,b] * Phi[k,i,b] * t[i] * resid[i,b].
    """
    t = t_ref[...]            # (m, 1)
    alpha = alpha_ref[...]    # (K, tb)
    x = x_ref[...]            # (m, tb)
    c = c_ref[...]            # (K, tb)

    phi = jnp.exp(-alpha[:, None, :] * t[None, :, :])         # (K, m, tb)  EUP
    cphi = phi * c[:, None, :]                                 # (K, m, tb)  VPU
    resid = jnp.sum(cphi, axis=0) - x                          # (m, tb)  K-reduce = VPU adds
    w = resid * t                                              # (m, tb)  lane-broadcast of t
    grad = -jnp.sum(cphi * w[None, :, :], axis=1)              # (K, tb)  m-reduce

    # clip_norm over K (NaN-safe; rsqrt lands on the otherwise-idle EUP slot)
    norm2 = jnp.sum(grad * grad, axis=0, keepdims=True)        # (1, tb)
    scale = jnp.where(norm2 < 1.0, 1.0, jax.lax.rsqrt(norm2))
    o_ref[...] = alpha + delta * (grad * scale)                # (K, tb) lane-dense store


# --------------------------------- glue ---------------------------------------
def _batch_tiling(B, batch_tile):
    """Lane-aligned batch tile; >= 2 grid steps when possible (v7x has 2 TensorCores)."""
    n_groups = -(-B // _LANE)                         # ceil(B / 128)
    gpt = max(1, min(batch_tile // _LANE, n_groups))  # lane-groups per tile
    if n_groups >= 2:
        gpt = min(gpt, -(-n_groups // 2))             # never one giant single-step grid
    tb = gpt * _LANE
    n_blocks = -(-n_groups // gpt)
    return tb, n_blocks, n_blocks * tb


def _pad_batch(x, alpha, Bp):
    """Pad the batch; dummy rows get distinct decay rates so their (discarded)
    normal equations stay well conditioned."""
    B = x.shape[0]
    K = alpha.shape[1]
    if Bp == B:
        return x, alpha
    pad = Bp - B
    x = jnp.concatenate([x, jnp.zeros((pad, x.shape[1]), x.dtype)], axis=0)
    dummy = jnp.broadcast_to(0.5 + jnp.arange(K, dtype=alpha.dtype) / K, (pad, K))
    alpha = jnp.concatenate([alpha, dummy], axis=0)
    return x, alpha


def _mosaic_params():
    return pltpu.CompilerParams(dimension_semantics=("parallel",),
                                vmem_limit_bytes=32 * 1024 * 1024)


def vp_gram(x, alpha, t, *, batch_tile=1024):
    """Pallas: G = Phi Phi^T, rhs = Phi x with Phi generated in-kernel (never in HBM).
    Returns G (B, K, K) and rhs (B, K)."""
    x = jnp.asarray(x, jnp.float32)
    alpha = jnp.asarray(alpha, jnp.float32)
    t = jnp.asarray(t, jnp.float32)
    B, m = x.shape
    K = alpha.shape[1]
    tb, n_blocks, Bp = _batch_tiling(B, batch_tile)
    xp, ap = _pad_batch(x, alpha, Bp)
    x_t, a_t = xp.T, ap.T                      # (m, Bp), (K, Bp): lane axis = batch
    t_col = t[:, None]                         # (m, 1)

    cost = pl.CostEstimate(
        flops=int(2 * Bp * K * (K + 2) * m),
        transcendentals=int(Bp * K * m),
        bytes_accessed=int(4 * (m + Bp * (m + K + K * K + K))))

    g_t, rhs_t = pl.pallas_call(
        gram_kernel,
        out_shape=(jax.ShapeDtypeStruct((K, K, Bp), jnp.float32),
                   jax.ShapeDtypeStruct((K, Bp), jnp.float32)),
        grid_spec=pltpu.PrefetchScalarGridSpec(
            num_scalar_prefetch=0,
            grid=(n_blocks,),
            in_specs=[
                pl.BlockSpec((m, 1), lambda b: (0, 0)),       # t (constant block)
                pl.BlockSpec((K, tb), lambda b: (0, b)),      # alpha^T
                pl.BlockSpec((m, tb), lambda b: (0, b)),      # x^T
            ],
            out_specs=(pl.BlockSpec((K, K, tb), lambda b: (0, 0, b)),   # G^T
                       pl.BlockSpec((K, tb), lambda b: (0, b))),        # rhs^T
        ),
        compiler_params=_mosaic_params(),
        cost_estimate=cost,
    )(t_col, a_t, x_t)

    G = jnp.transpose(g_t, (2, 0, 1))[:B]      # (B, K, K)
    rhs = rhs_t.T[:B]                          # (B, K)
    return G, rhs


def vp_update(x, alpha, c, t, *, delta=1e-3, batch_tile=1024):
    """Pallas: alpha + delta * clip_norm(residual @ Kaufman-Jacobian); Phi regenerated."""
    x = jnp.asarray(x, jnp.float32)
    alpha = jnp.asarray(alpha, jnp.float32)
    c = jnp.asarray(c, jnp.float32)
    t = jnp.asarray(t, jnp.float32)
    B, m = x.shape
    K = alpha.shape[1]
    tb, n_blocks, Bp = _batch_tiling(B, batch_tile)
    xp, ap = _pad_batch(x, alpha, Bp)
    if Bp != B:
        c = jnp.concatenate([c, jnp.zeros((Bp - B, K), jnp.float32)], axis=0)
    x_t, a_t, c_t = xp.T, ap.T, c.T
    t_col = t[:, None]

    cost = pl.CostEstimate(
        flops=int(8 * Bp * K * m),
        transcendentals=int(Bp * K * m),
        bytes_accessed=int(4 * (m + Bp * (m + 3 * K))))

    out_t = pl.pallas_call(
        functools.partial(update_kernel, delta=float(delta)),
        out_shape=jax.ShapeDtypeStruct((K, Bp), jnp.float32),
        grid_spec=pltpu.PrefetchScalarGridSpec(
            num_scalar_prefetch=0,
            grid=(n_blocks,),
            in_specs=[
                pl.BlockSpec((m, 1), lambda b: (0, 0)),       # t (constant block)
                pl.BlockSpec((K, tb), lambda b: (0, b)),      # alpha^T
                pl.BlockSpec((m, tb), lambda b: (0, b)),      # x^T
                pl.BlockSpec((K, tb), lambda b: (0, b)),      # c^T
            ],
            out_specs=pl.BlockSpec((K, tb), lambda b: (0, b)),
        ),
        compiler_params=_mosaic_params(),
        cost_estimate=cost,
    )(t_col, a_t, x_t, c_t)
    return out_t.T[:B]                         # (B, K)


def vp_layer_forward(x, alpha, t, *, delta=1e-3, reg=1e-4, batch_tile=1024):
    """VPLayer.forward: alpha_next = alpha + delta * clip_norm(residual @ J)."""
    alpha = jnp.asarray(alpha, jnp.float32)
    K = alpha.shape[1]
    G, rhs = vp_gram(x, alpha, t, batch_tile=batch_tile)
    c = jnp.linalg.solve(G + reg * jnp.eye(K, dtype=jnp.float32),
                         rhs[..., None])[..., 0]     # (B, K) tiny host-side solve
    return vp_update(x, alpha, c, t, delta=delta, batch_tile=batch_tile)


# ----------------------- Pure-JAX references (checking) ------------------------
def _function_system(alpha, t):
    """Synthetic FnSys: Phi[b, k, i] = exp(-alpha[b, k] * t[i])."""
    return jnp.exp(-alpha[:, :, None] * t[None, None, :])     # (B, K, m)


def vp_gram_ref(x, alpha, t):
    hp = jax.lax.Precision.HIGHEST
    Phi = _function_system(alpha, t)
    G = jnp.einsum('bkm,blm->bkl', Phi, Phi, precision=hp)
    rhs = jnp.einsum('bkm,bm->bk', Phi, x, precision=hp)
    return G, rhs


def vp_update_ref(x, alpha, c, t, *, delta=1e-3):
    hp = jax.lax.Precision.HIGHEST
    Phi = _function_system(alpha, t)
    dPhi = -t[None, None, :] * Phi
    resid = jnp.einsum('bkm,bk->bm', Phi, c, precision=hp) - x
    J = dPhi * c[:, :, None]                                  # Kaufman Jacobian (x c)
    grad = jnp.einsum('bm,bkm->bk', resid, J, precision=hp)
    norm = jnp.linalg.norm(grad, axis=1, keepdims=True)
    grad = jnp.where(norm < 1.0, grad, grad / norm)           # clip_norm
    return alpha + delta * grad


def vp_layer_ref(x, alpha, t, *, delta=1e-3, reg=1e-4):
    G, rhs = vp_gram_ref(x, alpha, t)
    K = alpha.shape[1]
    c = jnp.linalg.solve(G + reg * jnp.eye(K, dtype=jnp.float32), rhs[..., None])[..., 0]
    return vp_update_ref(x, alpha, c, t, delta=delta)


# ----------------------------------- main --------------------------------------
if __name__ == "__main__":
    B, m, K = 2, 128, 8          # batch, sample points, number of nonlinear params
    key = jax.random.PRNGKey(0)
    kc, ka, kn = jax.random.split(key, 3)

    t = jnp.linspace(0.0, 1.0, m, dtype=jnp.float32)
    # well-separated decay rates + jitter, and a signal (mostly) in the basis span,
    # so the demo's normal equations are well conditioned
    base = jnp.linspace(0.3, 3.0, K, dtype=jnp.float32)
    alpha = base[None, :] + 0.05 * jax.random.normal(ka, (B, K), dtype=jnp.float32)
    c_true = jax.random.normal(kc, (B, K), dtype=jnp.float32)
    x = jnp.einsum('bkm,bk->bm', _function_system(alpha, t), c_true)
    x = x + 0.01 * jax.random.normal(kn, (B, m), dtype=jnp.float32)

    delta, reg = 1e-3, 1e-3

    # 1) fused Gram/rhs kernel vs. reference einsums (tight)
    G, rhs = vp_gram(x, alpha, t)
    G_r, rhs_r = vp_gram_ref(x, alpha, t)
    np.testing.assert_allclose(np.asarray(G), np.asarray(G_r), rtol=1e-5, atol=1e-4)
    np.testing.assert_allclose(np.asarray(rhs), np.asarray(rhs_r), rtol=1e-5, atol=1e-4)

    # 2) fused update kernel vs. reference, given the same linear coefficients (tight)
    c = jnp.linalg.solve(G_r + reg * jnp.eye(K, dtype=jnp.float32),
                         rhs_r[..., None])[..., 0]
    a1 = vp_update(x, alpha, c, t, delta=delta)
    a1_r = vp_update_ref(x, alpha, c, t, delta=delta)
    np.testing.assert_allclose(np.asarray(a1), np.asarray(a1_r), rtol=1e-5, atol=1e-5)

    # 3) end-to-end forward; looser tolerance because the K x K normal-equation solve
    #    amplifies f32 rounding differences between the fused and reference Gram paths
    fwd = jax.jit(functools.partial(vp_layer_forward, delta=delta, reg=reg))
    alpha_next = jax.block_until_ready(fwd(x, alpha, t))
    alpha_ref = vp_layer_ref(x, alpha, t, delta=delta, reg=reg)
    np.testing.assert_allclose(np.asarray(alpha_next), np.asarray(alpha_ref),
                               rtol=0, atol=1e-3)
    print("KERNEL_OK")
</pallas_src>

<mosaic_0001>
module attributes {stable_mosaic.version = 11 : i64} {
  func.func @gram_kernel(%arg0: i32, %arg1: memref<128x1xf32, #tpu.memory_space<vmem>>, %arg2: memref<8x128xf32, #tpu.memory_space<vmem>>, %arg3: memref<128x128xf32, #tpu.memory_space<vmem>>, %arg4: memref<8x8x128xf32, #tpu.memory_space<vmem>>, %arg5: memref<8x128xf32, #tpu.memory_space<vmem>>) attributes {dimension_semantics = [#tpu.dimension_semantics<parallel>], iteration_bounds = array<i64: 1>, scalar_prefetch = 0 : i64, scratch_operands = 0 : i64, tpu.core_type = #tpu.core_type<tc>, window_params = [{pipeline_mode = #tpu.pipeline_mode<synchronous>, transform_indices = @transform_0, window_bounds = array<i64: 128, 1>}, {transform_indices = @transform_1, window_bounds = array<i64: 8, 128>}, {transform_indices = @transform_2, window_bounds = array<i64: 128, 128>}, {transform_indices = @transform_3, window_bounds = array<i64: 8, 8, 128>}, {transform_indices = @transform_4, window_bounds = array<i64: 8, 128>}]} {
    %c0 = arith.constant 0 : index
    %c0_0 = arith.constant 0 : index
    %0 = vector.load %arg1[%c0, %c0_0] : memref<128x1xf32, #tpu.memory_space<vmem>>, vector<128x1xf32>
    %c0_1 = arith.constant 0 : index
    %c0_2 = arith.constant 0 : index
    %1 = vector.load %arg2[%c0_1, %c0_2] : memref<8x128xf32, #tpu.memory_space<vmem>>, vector<8x128xf32>
    %c0_3 = arith.constant 0 : index
    %c0_4 = arith.constant 0 : index
    %2 = vector.load %arg3[%c0_3, %c0_4] : memref<128x128xf32, #tpu.memory_space<vmem>>, vector<128x128xf32>
    %3 = vector.shape_cast %1 : vector<8x128xf32> to vector<8x1x128xf32>
    %cst = arith.constant 0.000000e+00 : f32
    %4 = vector.broadcast %cst : f32 to vector<8x1x128xf32>
    %5 = arith.subf %4, %3 : vector<8x1x128xf32>
    %6 = vector.shape_cast %0 : vector<128x1xf32> to vector<1x128x1xf32>
    %7 = vector.broadcast %5 : vector<8x1x128xf32> to vector<8x128x128xf32>
    %8 = vector.broadcast %6 : vector<1x128x1xf32> to vector<8x128x128xf32>
    %9 = arith.mulf %7, %8 : vector<8x128x128xf32>
    %10 = math.exp %9 : vector<8x128x128xf32>
    %11 = vector.shape_cast %2 : vector<128x128xf32> to vector<1x128x128xf32>
    %12 = vector.broadcast %11 : vector<1x128x128xf32> to vector<8x128x128xf32>
    %13 = arith.mulf %10, %12 : vector<8x128x128xf32>
    %cst_5 = arith.constant dense<0.000000e+00> : vector<8x128xf32>
    %14 = vector.multi_reduction <add>, %13, %cst_5 [1] : vector<8x128x128xf32> to vector<8x128xf32>
    %c0_6 = arith.constant 0 : index
    %c0_7 = arith.constant 0 : index
    %15 = vector.load %arg5[%c0_6, %c0_7] : memref<8x128xf32, #tpu.memory_space<vmem>>, vector<8x128xf32>
    tpu.vector_store %arg5[%c0_6, %c0_7], %14 {strides = array<i32>} : memref<8x128xf32, #tpu.memory_space<vmem>>, vector<8x128xf32>,
    %16 = vector.extract_strided_slice %10 {offsets = [0, 0, 0], sizes = [1, 128, 128], strides = [1, 1, 1]} : vector<8x128x128xf32> to vector<1x128x128xf32>
    %17 = vector.shape_cast %16 : vector<1x128x128xf32> to vector<128x128xf32>
    %18 = vector.shape_cast %17 : vector<128x128xf32> to vector<1x128x128xf32>
    %19 = vector.broadcast %18 : vector<1x128x128xf32> to vector<8x128x128xf32>
    %20 = arith.mulf %10, %19 : vector<8x128x128xf32>
    %cst_8 = arith.constant dense<0.000000e+00> : vector<8x128xf32>
    %21 = vector.multi_reduction <add>, %20, %cst_8 [1] : vector<8x128x128xf32> to vector<8x128xf32>
    %c0_9 = arith.constant 0 : index
    %c0_10 = arith.constant 0 : index
    %c0_11 = arith.constant 0 : index
    %22 = vector.load %arg4[%c0_9, %c0_10, %c0_11] : memref<8x8x128xf32, #tpu.memory_space<vmem>>, vector<1x8x128xf32>
    %23 = vector.shape_cast %22 : vector<1x8x128xf32> to vector<8x128xf32>
    %24 = vector.shape_cast %21 : vector<8x128xf32> to vector<1x8x128xf32>
    tpu.vector_store %arg4[%c0_9, %c0_10, %c0_11], %24 {strides = array<i32>} : memref<8x8x128xf32, #tpu.memory_space<vmem>>, vector<1x8x128xf32>,
    %25 = vector.extract_strided_slice %10 {offsets = [1, 0, 0], sizes = [1, 128, 128], strides = [1, 1, 1]} : vector<8x128x128xf32> to vector<1x128x128xf32>
    %26 = vector.shape_cast %25 : vector<1x128x128xf32> to vector<128x128xf32>
    %27 = vector.shape_cast %26 : vector<128x128xf32> to vector<1x128x128xf32>
    %28 = vector.broadcast %27 : vector<1x128x128xf32> to vector<8x128x128xf32>
    %29 = arith.mulf %10, %28 : vector<8x128x128xf32>
    %cst_12 = arith.constant dense<0.000000e+00> : vector<8x128xf32>
    %30 = vector.multi_reduction <add>, %29, %cst_12 [1] : vector<8x128x128xf32> to vector<8x128xf32>
    %c1 = arith.constant 1 : index
    %c0_13 = arith.constant 0 : index
    %c0_14 = arith.constant 0 : index
    %31 = vector.load %arg4[%c1, %c0_13, %c0_14] : memref<8x8x128xf32, #tpu.memory_space<vmem>>, vector<1x8x128xf32>
    %32 = vector.shape_cast %31 : vector<1x8x128xf32> to vector<8x128xf32>
    %33 = vector.shape_cast %30 : vector<8x128xf32> to vector<1x8x128xf32>
    tpu.vector_store %arg4[%c1, %c0_13, %c0_14], %33 {strides = array<i32>} : memref<8x8x128xf32, #tpu.memory_space<vmem>>, vector<1x8x128xf32>,
    %34 = vector.extract_strided_slice %10 {offsets = [2, 0, 0], sizes = [1, 128, 128], strides = [1, 1, 1]} : vector<8x128x128xf32> to vector<1x128x128xf32>
    %35 = vector.shape_cast %34 : vector<1x128x128xf32> to vector<128x128xf32>
    %36 = vector.shape_cast %35 : vector<128x128xf32> to vector<1x128x128xf32>
    %37 = vector.broadcast %36 : vector<1x128x128xf32> to vector<8x128x128xf32>
    %38 = arith.mulf %10, %37 : vector<8x128x128xf32>
    %cst_15 = arith.constant dense<0.000000e+00> : vector<8x128xf32>
    %39 = vector.multi_reduction <add>, %38, %cst_15 [1] : vector<8x128x128xf32> to vector<8x128xf32>
    %c2 = arith.constant 2 : index
    %c0_16 = arith.constant 0 : index
    %c0_17 = arith.constant 0 : index
    %40 = vector.load %arg4[%c2, %c0_16, %c0_17] : memref<8x8x128xf32, #tpu.memory_space<vmem>>, vector<1x8x128xf32>
    %41 = vector.shape_cast %40 : vector<1x8x128xf32> to vector<8x128xf32>
    %42 = vector.shape_cast %39 : vector<8x128xf32> to vector<1x8x128xf32>
    tpu.vector_store %arg4[%c2, %c0_16, %c0_17], %42 {strides = array<i32>} : memref<8x8x128xf32, #tpu.memory_space<vmem>>, vector<1x8x128xf32>,
    %43 = vector.extract_strided_slice %10 {offsets = [3, 0, 0], sizes = [1, 128, 128], strides = [1, 1, 1]} : vector<8x128x128xf32> to vector<1x128x128xf32>
    %44 = vector.shape_cast %43 : vector<1x128x128xf32> to vector<128x128xf32>
    %45 = vector.shape_cast %44 : vector<128x128xf32> to vector<1x128x128xf32>
    %46 = vector.broadcast %45 : vector<1x128x128xf32> to vector<8x128x128xf32>
    %47 = arith.mulf %10, %46 : vector<8x128x128xf32>
    %cst_18 = arith.constant dense<0.000000e+00> : vector<8x128xf32>
    %48 = vector.multi_reduction <add>, %47, %cst_18 [1] : vector<8x128x128xf32> to vector<8x128xf32>
    %c3 = arith.constant 3 : index
    %c0_19 = arith.constant 0 : index
    %c0_20 = arith.constant 0 : index
    %49 = vector.load %arg4[%c3, %c0_19, %c0_20] : memref<8x8x128xf32, #tpu.memory_space<vmem>>, vector<1x8x128xf32>
    %50 = vector.shape_cast %49 : vector<1x8x128xf32> to vector<8x128xf32>
    %51 = vector.shape_cast %48 : vector<8x128xf32> to vector<1x8x128xf32>
    tpu.vector_store %arg4[%c3, %c0_19, %c0_20], %51 {strides = array<i32>} : memref<8x8x128xf32, #tpu.memory_space<vmem>>, vector<1x8x128xf32>,
    %52 = vector.extract_strided_slice %10 {offsets = [4, 0, 0], sizes = [1, 128, 128], strides = [1, 1, 1]} : vector<8x128x128xf32> to vector<1x128x128xf32>
    %53 = vector.shape_cast %52 : vector<1x128x128xf32> to vector<128x128xf32>
    %54 = vector.shape_cast %53 : vector<128x128xf32> to vector<1x128x128xf32>
    %55 = vector.broadcast %54 : vector<1x128x128xf32> to vector<8x128x128xf32>
    %56 = arith.mulf %10, %55 : vector<8x128x128xf32>
    %cst_21 = arith.constant dense<0.000000e+00> : vector<8x128xf32>
    %57 = vector.multi_reduction <add>, %56, %cst_21 [1] : vector<8x128x128xf32> to vector<8x128xf32>
    %c4 = arith.constant 4 : index
    %c0_22 = arith.constant 0 : index
    %c0_23 = arith.constant 0 : index
    %58 = vector.load %arg4[%c4, %c0_22, %c0_23] : memref<8x8x128xf32, #tpu.memory_space<vmem>>, vector<1x8x128xf32>
    %59 = vector.shape_cast %58 : vector<1x8x128xf32> to vector<8x128xf32>
    %60 = vector.shape_cast %57 : vector<8x128xf32> to vector<1x8x128xf32>
    tpu.vector_store %arg4[%c4, %c0_22, %c0_23], %60 {strides = array<i32>} : memref<8x8x128xf32, #tpu.memory_space<vmem>>, vector<1x8x128xf32>,
    %61 = vector.extract_strided_slice %10 {offsets = [5, 0, 0], sizes = [1, 128, 128], strides = [1, 1, 1]} : vector<8x128x128xf32> to vector<1x128x128xf32>
    %62 = vector.shape_cast %61 : vector<1x128x128xf32> to vector<128x128xf32>
    %63 = vector.shape_cast %62 : vector<128x128xf32> to vector<1x128x128xf32>
    %64 = vector.broadcast %63 : vector<1x128x128xf32> to vector<8x128x128xf32>
    %65 = arith.mulf %10, %64 : vector<8x128x128xf32>
    %cst_24 = arith.constant dense<0.000000e+00> : vector<8x128xf32>
    %66 = vector.multi_reduction <add>, %65, %cst_24 [1] : vector<8x128x128xf32> to vector<8x128xf32>
    %c5 = arith.constant 5 : index
    %c0_25 = arith.constant 0 : index
    %c0_26 = arith.constant 0 : index
    %67 = vector.load %arg4[%c5, %c0_25, %c0_26] : memref<8x8x128xf32, #tpu.memory_space<vmem>>, vector<1x8x128xf32>
    %68 = vector.shape_cast %67 : vector<1x8x128xf32> to vector<8x128xf32>
    %69 = vector.shape_cast %66 : vector<8x128xf32> to vector<1x8x128xf32>
    tpu.vector_store %arg4[%c5, %c0_25, %c0_26], %69 {strides = array<i32>} : memref<8x8x128xf32, #tpu.memory_space<vmem>>, vector<1x8x128xf32>,
    %70 = vector.extract_strided_slice %10 {offsets = [6, 0, 0], sizes = [1, 128, 128], strides = [1, 1, 1]} : vector<8x128x128xf32> to vector<1x128x128xf32>
    %71 = vector.shape_cast %70 : vector<1x128x128xf32> to vector<128x128xf32>
    %72 = vector.shape_cast %71 : vector<128x128xf32> to vector<1x128x128xf32>
    %73 = vector.broadcast %72 : vector<1x128x128xf32> to vector<8x128x128xf32>
    %74 = arith.mulf %10, %73 : vector<8x128x128xf32>
    %cst_27 = arith.constant dense<0.000000e+00> : vector<8x128xf32>
    %75 = vector.multi_reduction <add>, %74, %cst_27 [1] : vector<8x128x128xf32> to vector<8x128xf32>
    %c6 = arith.constant 6 : index
    %c0_28 = arith.constant 0 : index
    %c0_29 = arith.constant 0 : index
    %76 = vector.load %arg4[%c6, %c0_28, %c0_29] : memref<8x8x128xf32, #tpu.memory_space<vmem>>, vector<1x8x128xf32>
    %77 = vector.shape_cast %76 : vector<1x8x128xf32> to vector<8x128xf32>
    %78 = vector.shape_cast %75 : vector<8x128xf32> to vector<1x8x128xf32>
    tpu.vector_store %arg4[%c6, %c0_28, %c0_29], %78 {strides = array<i32>} : memref<8x8x128xf32, #tpu.memory_space<vmem>>, vector<1x8x128xf32>,
    %79 = vector.extract_strided_slice %10 {offsets = [7, 0, 0], sizes = [1, 128, 128], strides = [1, 1, 1]} : vector<8x128x128xf32> to vector<1x128x128xf32>
    %80 = vector.shape_cast %79 : vector<1x128x128xf32> to vector<128x128xf32>
    %81 = vector.shape_cast %80 : vector<128x128xf32> to vector<1x128x128xf32>
    %82 = vector.broadcast %81 : vector<1x128x128xf32> to vector<8x128x128xf32>
    %83 = arith.mulf %10, %82 : vector<8x128x128xf32>
    %cst_30 = arith.constant dense<0.000000e+00> : vector<8x128xf32>
    %84 = vector.multi_reduction <add>, %83, %cst_30 [1] : vector<8x128x128xf32> to vector<8x128xf32>
    %c7 = arith.constant 7 : index
    %c0_31 = arith.constant 0 : index
    %c0_32 = arith.constant 0 : index
    %85 = vector.load %arg4[%c7, %c0_31, %c0_32] : memref<8x8x128xf32, #tpu.memory_space<vmem>>, vector<1x8x128xf32>
    %86 = vector.shape_cast %85 : vector<1x8x128xf32> to vector<8x128xf32>
    %87 = vector.shape_cast %84 : vector<8x128xf32> to vector<1x8x128xf32>
    tpu.vector_store %arg4[%c7, %c0_31, %c0_32], %87 {strides = array<i32>} : memref<8x8x128xf32, #tpu.memory_space<vmem>>, vector<1x8x128xf32>,
    return
  }
  func.func @transform_0(%arg0: i32) -> (i32, i32) {
    %c0_i32 = arith.constant 0 : i32
    %c0_i32_0 = arith.constant 0 : i32
    %c0_i32_1 = arith.constant 0 : i32
    return %c0_i32, %c0_i32_0 : i32, i32
  }
  func.func @transform_1(%arg0: i32) -> (i32, i32) {
    %c0_i32 = arith.constant 0 : i32
    %c0_i32_0 = arith.constant 0 : i32
    return %c0_i32, %arg0 : i32, i32
  }
  func.func @transform_2(%arg0: i32) -> (i32, i32) {
    %c0_i32 = arith.constant 0 : i32
    %c0_i32_0 = arith.constant 0 : i32
    return %c0_i32, %arg0 : i32, i32
  }
  func.func @transform_3(%arg0: i32) -> (i32, i32, i32) {
    %c0_i32 = arith.constant 0 : i32
    %c0_i32_0 = arith.constant 0 : i32
    %c0_i32_1 = arith.constant 0 : i32
    return %c0_i32, %c0_i32_0, %arg0 : i32, i32, i32
  }
  func.func @transform_4(%arg0: i32) -> (i32, i32) {
    %c0_i32 = arith.constant 0 : i32
    %c0_i32_0 = arith.constant 0 : i32
    return %c0_i32, %arg0 : i32, i32
  }
}

</mosaic_0001>

<llo_original>
// kernel: tpu_custom_call.1
$region0: #{tpu_custom_call.1}
  #allocation0 [shape = 'u32[]', space=smem, size = 0x4, offset = 0x4, fixed_abs, tag = 'smem constant byte address 0x4 - core index']
  #allocation1 [shape = 'u32[72,128]{1,0:T(1,128)}', space=vmem, size = 0x9000, scoped, tag = 'internal scratch']
  %s0 = inlined_call_operand.vmem [shape: f32[128,1], index: 0, kind: input, shape index: {}]
  %s1 = inlined_call_operand.hbm [shape: f32[8,128], index: 1, kind: input, shape index: {}]
  %s2 = inlined_call_operand.vmem [shape: f32[128,128], index: 2, kind: input, shape index: {}]
  %s3 = inlined_call_operand.hbm [shape: f32[8,8,128], index: 3, kind: output, shape index: {0}]
  %s4 = inlined_call_operand.hbm [shape: f32[8,128], index: 4, kind: output, shape index: {1}]
  %5 = xla_tuple %s3, %s4
  %s6 = sld [smem:[#allocation0]]
  $region34: #{tpu_custom_call.1} parent=0
    _
  %s8 = ssub.s32 1, %s6
  %s9 = scalar_select 0, %s8, %s6
  $region1: #{tpu_custom_call.1} parent=0
    #allocation2 [shape = 'u8[4096]{0}', space=vmem, size = 0x1000, scoped, tag = 'input window, operand 1, single buffered']
    #allocation3 [shape = 's32[1]{0}', space=sflag, size = 0x4, scoped, tag = 'scoped memory for tpu_custom_call.1']
    #allocation4 [shape = 's32[1]{0}', space=sflag, size = 0x4, scoped, tag = 'scoped memory for tpu_custom_call.1']
    #allocation5 [shape = 'u8[32768]{0}', space=vmem, size = 0x8000, scoped, tag = 'output window, operand 0, single buffered']
    #allocation6 [shape = 'u8[4096]{0}', space=vmem, size = 0x1000, scoped, tag = 'output window, operand 1, single buffered']
    #allocation7 [shape = 's32[1]{0}', space=sflag, size = 0x4, scoped, tag = 'scoped memory for tpu_custom_call.1']
    %10 = vsyncpa [#allocation3], 0
    %11 = vsyncpa [#allocation4], 0
    %12 = vsyncpa [#allocation7], 0
    // Predicated region
    $region2: #{tpu_custom_call.1} parent=1 // pred_check
      _
    $region3: #{tpu_custom_call.1} parent=1 // pred_check_branch
      %14 = sbr.rel (0) target = $region5
    $region4: #{tpu_custom_call.1} parent=1 // pred_region
      _
    $region5: #{tpu_custom_call.1} parent=1 // pred_fallthru
      _
    // Predicated region
    $region6: #{tpu_custom_call.1} parent=1 // pred_check
      _
    $region7: #{tpu_custom_call.1} parent=1 // pred_check_branch
      %16 = sbr.rel (0) target = $region9
    $region8: #{tpu_custom_call.1} parent=1 // pred_region
      %18 = vsyncadd [#allocation3], 0
      %s20 = sshll.u32 %s1, 4
      %s21 = int_to_ptr.hbm [resolvable:$true] %s20
      %s22 = sshll.u32 [#allocation2], 4
      %s23 = int_to_ptr.vmem [resolvable:$true] %s22
      %25 = dma.hbm_to_vmem [thread:$0]  %s21, 128, %s23, [#allocation3]
    $region9: #{tpu_custom_call.1} parent=1 // pred_fallthru
      _
    // Predicated region
    $region10: #{tpu_custom_call.1} parent=1 // pred_check
      _
    $region11: #{tpu_custom_call.1} parent=1 // pred_check_branch
      %27 = sbr.rel (0) target = $region13
    $region12: #{tpu_custom_call.1} parent=1 // pred_region
      _
    $region13: #{tpu_custom_call.1} parent=1 // pred_fallthru
      _
    // Predicated region
    $region14: #{tpu_custom_call.1} parent=1 // pred_check
      _
    $region15: #{tpu_custom_call.1} parent=1 // pred_check_branch
      %29 = sbr.rel (0) target = $region17
    $region16: #{tpu_custom_call.1} parent=1 // pred_region
      %31 = dma.done [#allocation3], 128
    $region17: #{tpu_custom_call.1} parent=1 // pred_fallthru
      _
    %v32 = vld [vmem:[%s0] sm:$0xff]
    %v33 = vld [vmem:[%s0 + $0x8] sm:$0xff]
    %v34 = vld [vmem:[%s0 + $0x10] sm:$0xff]
    %v35 = vld [vmem:[%s0 + $0x18] sm:$0xff]
    %v36 = vld [vmem:[%s0 + $0x20] sm:$0xff]
    %v37 = vld [vmem:[%s0 + $0x28] sm:$0xff]
    %v38 = vld [vmem:[%s0 + $0x30] sm:$0xff]
    %v39 = vld [vmem:[%s0 + $0x38] sm:$0xff]
    %v40 = vld [vmem:[%s0 + $0x40] sm:$0xff]
    %v41 = vld [vmem:[%s0 + $0x48] sm:$0xff]
    %v42 = vld [vmem:[%s0 + $0x50] sm:$0xff]
    %v43 = vld [vmem:[%s0 + $0x58] sm:$0xff]
    %v44 = vld [vmem:[%s0 + $0x60] sm:$0xff]
    %v45 = vld [vmem:[%s0 + $0x68] sm:$0xff]
    %v46 = vld [vmem:[%s0 + $0x70] sm:$0xff]
    %v47 = vld [vmem:[%s0 + $0x78] sm:$0xff]
    %v48 = vld [vmem:[#allocation2] sm:$0xff]
    %v49 = vld [vmem:[%s2] sm:$0xff]
    %v50 = vld [vmem:[%s2 + $0x8] sm:$0xff]
    %v51 = vld [vmem:[%s2 + $0x10] sm:$0xff]
    %v52 = vld [vmem:[%s2 + $0x18] sm:$0xff]
    %v53 = vld [vmem:[%s2 + $0x20] sm:$0xff]
    %v54 = vld [vmem:[%s2 + $0x28] sm:$0xff]
    %v55 = vld [vmem:[%s2 + $0x30] sm:$0xff]
    %v56 = vld [vmem:[%s2 + $0x38] sm:$0xff]
    %v57 = vld [vmem:[%s2 + $0x40] sm:$0xff]
    %v58 = vld [vmem:[%s2 + $0x48] sm:$0xff]
    %v59 = vld [vmem:[%s2 + $0x50] sm:$0xff]
    %v60 = vld [vmem:[%s2 + $0x58] sm:$0xff]
    %v61 = vld [vmem:[%s2 + $0x60] sm:$0xff]
    %v62 = vld [vmem:[%s2 + $0x68] sm:$0xff]
    %v63 = vld [vmem:[%s2 + $0x70] sm:$0xff]
    %v64 = vld [vmem:[%s2 + $0x78] sm:$0xff]
    %v66 = vrot.slane %v48, 1
    %v67 = vrot.slane %v48, 2
    %v68 = vrot.slane %v48, 3
    %v69 = vrot.slane %v48, 4
    %v70 = vrot.slane %v48, 5
    %v71 = vrot.slane %v48, 6
    %v72 = vrot.slane %v48, 7
    %v80 = vsub.f32 0.0, %v48
    %v81 = vsub.f32 0.0, %v66
    %v82 = vsub.f32 0.0, %v67
    %v83 = vsub.f32 0.0, %v68
    %v84 = vsub.f32 0.0, %v69
    %v85 = vsub.f32 0.0, %v70
    %v86 = vsub.f32 0.0, %v71
    %v87 = vsub.f32 0.0, %v72
    %v96 = vperm.slane %v80, 0
    %v97 = vperm.slane %v81, 0
    %v98 = vperm.slane %v82, 0
    %v99 = vperm.slane %v83, 0
    %v100 = vperm.slane %v84, 0
    %v101 = vperm.slane %v85, 0
    %v102 = vperm.slane %v86, 0
    %v103 = vperm.slane %v87, 0
    %113 = vset.pattern.permute.xlu0 0
    %114 = vperm.xlu0 %113, %v32
    %v115 = vpop.permute.xlu0 %114
    %118 = vset.pattern.permute.xlu0 0
    %119 = vperm.xlu0 %118, %v33
    %v120 = vpop.permute.xlu0 %119
    %123 = vset.pattern.permute.xlu0 0
    %124 = vperm.xlu0 %123, %v34
    %v125 = vpop.permute.xlu0 %124
    %128 = vset.pattern.permute.xlu0 0
    %129 = vperm.xlu0 %128, %v35
    %v130 = vpop.permute.xlu0 %129
    %133 = vset.pattern.permute.xlu0 0
    %134 = vperm.xlu0 %133, %v36
    %v135 = vpop.permute.xlu0 %134
    %138 = vset.pattern.permute.xlu0 0
    %139 = vperm.xlu0 %138, %v37
    %v140 = vpop.permute.xlu0 %139
    %143 = vset.pattern.permute.xlu0 0
    %144 = vperm.xlu0 %143, %v38
    %v145 = vpop.permute.xlu0 %144
    %148 = vset.pattern.permute.xlu0 0
    %149 = vperm.xlu0 %148, %v39
    %v150 = vpop.permute.xlu0 %149
    %153 = vset.pattern.permute.xlu0 0
    %154 = vperm.xlu0 %153, %v40
    %v155 = vpop.permute.xlu0 %154
    %158 = vset.pattern.permute.xlu0 0
    %159 = vperm.xlu0 %158, %v41
    %v160 = vpop.permute.xlu0 %159
    %163 = vset.pattern.permute.xlu0 0
    %164 = vperm.xlu0 %163, %v42
    %v165 = vpop.permute.xlu0 %164
    %168 = vset.pattern.permute.xlu0 0
    %169 = vperm.xlu0 %168, %v43
    %v170 = vpop.permute.xlu0 %169
    %173 = vset.pattern.permute.xlu0 0
    %174 = vperm.xlu0 %173, %v44
    %v175 = vpop.permute.xlu0 %174
    %178 = vset.pattern.permute.xlu0 0
    %179 = vperm.xlu0 %178, %v45
    %v180 = vpop.permute.xlu0 %179
    %183 = vset.pattern.permute.xlu0 0
    %184 = vperm.xlu0 %183, %v46
    %v185 = vpop.permute.xlu0 %184
    %188 = vset.pattern.permute.xlu0 0
    %189 = vperm.xlu0 %188, %v47
    %v190 = vpop.permute.xlu0 %189
    %v192 = vmul.f32 %v96, %v115
    %v193 = vmul.f32 %v96, %v120
    %v194 = vmul.f32 %v96, %v125
    %v195 = vmul.f32 %v96, %v130
    %v196 = vmul.f32 %v96, %v135
    %v197 = vmul.f32 %v96, %v140
    %v198 = vmul.f32 %v96, %v145
    %v199 = vmul.f32 %v96, %v150
    %v200 = vmul.f32 %v96, %v155
    %v201 = vmul.f32 %v96, %v160
    %v202 = vmul.f32 %v96, %v165
    %v203 = vmul.f32 %v96, %v170
    %v204 = vmul.f32 %v96, %v175
    %v205 = vmul.f32 %v96, %v180
    %v206 = vmul.f32 %v96, %v185
    %v207 = vmul.f32 %v96, %v190
    %v208 = vmul.f32 %v97, %v115
    %v209 = vmul.f32 %v97, %v120
    %v210 = vmul.f32 %v97, %v125
    %v211 = vmul.f32 %v97, %v130
    %v212 = vmul.f32 %v97, %v135
    %v213 = vmul.f32 %v97, %v140
    %v214 = vmul.f32 %v97, %v145
    %v215 = vmul.f32 %v97, %v150
    %v216 = vmul.f32 %v97, %v155
    %v217 = vmul.f32 %v97, %v160
    %v218 = vmul.f32 %v97, %v165
    %v219 = vmul.f32 %v97, %v170
    %v220 = vmul.f32 %v97, %v175
    %v221 = vmul.f32 %v97, %v180
    %v222 = vmul.f32 %v97, %v185
    %v223 = vmul.f32 %v97, %v190
    %v224 = vmul.f32 %v98, %v115
    %v225 = vmul.f32 %v98, %v120
    %v226 = vmul.f32 %v98, %v125
    %v227 = vmul.f32 %v98, %v130
    %v228 = vmul.f32 %v98, %v135
    %v229 = vmul.f32 %v98, %v140
    %v230 = vmul.f32 %v98, %v145
    %v231 = vmul.f32 %v98, %v150
    %v232 = vmul.f32 %v98, %v155
    %v233 = vmul.f32 %v98, %v160
    %v234 = vmul.f32 %v98, %v165
    %v235 = vmul.f32 %v98, %v170
    %v236 = vmul.f32 %v98, %v175
    %v237 = vmul.f32 %v98, %v180
    %v238 = vmul.f32 %v98, %v185
    %v239 = vmul.f32 %v98, %v190
    %v240 = vmul.f32 %v99, %v115
    %v241 = vmul.f32 %v99, %v120
    %v242 = vmul.f32 %v99, %v125
    %v243 = vmul.f32 %v99, %v130
    %v244 = vmul.f32 %v99, %v135
    %v245 = vmul.f32 %v99, %v140
    %v246 = vmul.f32 %v99, %v145
    %v247 = vmul.f32 %v99, %v150
    %v248 = vmul.f32 %v99, %v155
    %v249 = vmul.f32 %v99, %v160
    %v250 = vmul.f32 %v99, %v165
    %v251 = vmul.f32 %v99, %v170
    %v252 = vmul.f32 %v99, %v175
    %v253 = vmul.f32 %v99, %v180
    %v254 = vmul.f32 %v99, %v185
    %v255 = vmul.f32 %v99, %v190
    %v256 = vmul.f32 %v100, %v115
    %v257 = vmul.f32 %v100, %v120
    %v258 = vmul.f32 %v100, %v125
    %v259 = vmul.f32 %v100, %v130
    %v260 = vmul.f32 %v100, %v135
    %v261 = vmul.f32 %v100, %v140
    %v262 = vmul.f32 %v100, %v145
    %v263 = vmul.f32 %v100, %v150
    %v264 = vmul.f32 %v100, %v155
    %v265 = vmul.f32 %v100, %v160
    %v266 = vmul.f32 %v100, %v165
    %v267 = vmul.f32 %v100, %v170
    %v268 = vmul.f32 %v100, %v175
    %v269 = vmul.f32 %v100, %v180
    %v270 = vmul.f32 %v100, %v185
    %v271 = vmul.f32 %v100, %v190
    %v272 = vmul.f32 %v101, %v115
    %v273 = vmul.f32 %v101, %v120
    %v274 = vmul.f32 %v101, %v125
    %v275 = vmul.f32 %v101, %v130
    %v276 = vmul.f32 %v101, %v135
    %v277 = vmul.f32 %v101, %v140
    %v278 = vmul.f32 %v101, %v145
    %v279 = vmul.f32 %v101, %v150
    %v280 = vmul.f32 %v101, %v155
    %v281 = vmul.f32 %v101, %v160
    %v282 = vmul.f32 %v101, %v165
    %v283 = vmul.f32 %v101, %v170
    %v284 = vmul.f32 %v101, %v175
    %v285 = vmul.f32 %v101, %v180
    %v286 = vmul.f32 %v101, %v185
    %v287 = vmul.f32 %v101, %v190
    %v288 = vmul.f32 %v102, %v115
    %v289 = vmul.f32 %v102, %v120
    %v290 = vmul.f32 %v102, %v125
    %v291 = vmul.f32 %v102, %v130
    %v292 = vmul.f32 %v102, %v135
    %v293 = vmul.f32 %v102, %v140
    %v294 = vmul.f32 %v102, %v145
    %v295 = vmul.f32 %v102, %v150
    %v296 = vmul.f32 %v102, %v155
    %v297 = vmul.f32 %v102, %v160
    %v298 = vmul.f32 %v102, %v165
    %v299 = vmul.f32 %v102, %v170
    %v300 = vmul.f32 %v102, %v175
    %v301 = vmul.f32 %v102, %v180
    %v302 = vmul.f32 %v102, %v185
    %v303 = vmul.f32 %v102, %v190
    %v304 = vmul.f32 %v103, %v115
    %v305 = vmul.f32 %v103, %v120
    %v306 = vmul.f32 %v103, %v125
    %v307 = vmul.f32 %v103, %v130
    %v308 = vmul.f32 %v103, %v135
    %v309 = vmul.f32 %v103, %v140
    %v310 = vmul.f32 %v103, %v145
    %v311 = vmul.f32 %v103, %v150
    %v312 = vmul.f32 %v103, %v155
    %v313 = vmul.f32 %v103, %v160
    %v314 = vmul.f32 %v103, %v165
    %v315 = vmul.f32 %v103, %v170
    %v316 = vmul.f32 %v103, %v175
    %v317 = vmul.f32 %v103, %v180
    %v318 = vmul.f32 %v103, %v185
    %v319 = vmul.f32 %v103, %v190
    %v320 = vmul.f32 %v192, 1.442695
    %v321 = vpow.pop %v320
    %v322 = vmul.f32 %v193, 1.442695
    %v323 = vpow.pop %v322
    %v324 = vmul.f32 %v194, 1.442695
    %v325 = vpow.pop %v324
    %v326 = vmul.f32 %v195, 1.442695
    %v327 = vpow.pop %v326
    %v328 = vmul.f32 %v196, 1.442695
    %v329 = vpow.pop %v328
    %v330 = vmul.f32 %v197, 1.442695
    %v331 = vpow.pop %v330
    %v332 = vmul.f32 %v198, 1.442695
    %v333 = vpow.pop %v332
    %v334 = vmul.f32 %v199, 1.442695
    %v335 = vpow.pop %v334
    %v336 = vmul.f32 %v200, 1.442695
    %v337 = vpow.pop %v336
    %v338 = vmul.f32 %v201, 1.442695
    %v339 = vpow.pop %v338
    %v340 = vmul.f32 %v202, 1.442695
    %v341 = vpow.pop %v340
    %v342 = vmul.f32 %v203, 1.442695
    %v343 = vpow.pop %v342
    %v344 = vmul.f32 %v204, 1.442695
    %v345 = vpow.pop %v344
    %v346 = vmul.f32 %v205, 1.442695
    %v347 = vpow.pop %v346
    %v348 = vmul.f32 %v206, 1.442695
    %v349 = vpow.pop %v348
    %v350 = vmul.f32 %v207, 1.442695
    %v351 = vpow.pop %v350
    %v352 = vmul.f32 %v208, 1.442695
    %v353 = vpow.pop %v352
    %v354 = vmul.f32 %v209, 1.442695
    %v355 = vpow.pop %v354
    %v356 = vmul.f32 %v210, 1.442695
    %v357 = vpow.pop %v356
    %v358 = vmul.f32 %v211, 1.442695
    %v359 = vpow.pop %v358
    %v360 = vmul.f32 %v212, 1.442695
    %v361 = vpow.pop %v360
    %v362 = vmul.f32 %v213, 1.442695
    %v363 = vpow.pop %v362
    %v364 = vmul.f32 %v214, 1.442695
    %v365 = vpow.pop %v364
    %v366 = vmul.f32 %v215, 1.442695
    %v367 = vpow.pop %v366
    %v368 = vmul.f32 %v216, 1.442695
    %v369 = vpow.pop %v368
    %v370 = vmul.f32 %v217, 1.442695
    %v371 = vpow.pop %v370
    %v372 = vmul.f32 %v218, 1.442695
    %v373 = vpow.pop %v372
    %v374 = vmul.f32 %v219, 1.442695
    %v375 = vpow.pop %v374
    %v376 = vmul.f32 %v220, 1.442695
    %v377 = vpow.pop %v376
    %v378 = vmul.f32 %v221, 1.442695
    %v379 = vpow.pop %v378
    %v380 = vmul.f32 %v222, 1.442695
    %v381 = vpow.pop %v380
    %v382 = vmul.f32 %v223, 1.442695
    %v383 = vpow.pop %v382
    %v384 = vmul.f32 %v224, 1.442695
    %v385 = vpow.pop %v384
    %v386 = vmul.f32 %v225, 1.442695
    %v387 = vpow.pop %v386
    %v388 = vmul.f32 %v226, 1.442695
    %v389 = vpow.pop %v388
    %v390 = vmul.f32 %v227, 1.442695
    %v391 = vpow.pop %v390
    %v392 = vmul.f32 %v228, 1.442695
    %v393 = vpow.pop %v392
    %v394 = vmul.f32 %v229, 1.442695
    %v395 = vpow.pop %v394
    %v396 = vmul.f32 %v230, 1.442695
    %v397 = vpow.pop %v396
    %v398 = vmul.f32 %v231, 1.442695
    %v399 = vpow.pop %v398
    %v400 = vmul.f32 %v232, 1.442695
    %v401 = vpow.pop %v400
    %v402 = vmul.f32 %v233, 1.442695
    %v403 = vpow.pop %v402
    %v404 = vmul.f32 %v234, 1.442695
    %v405 = vpow.pop %v404
    %v406 = vmul.f32 %v235, 1.442695
    %v407 = vpow.pop %v406
    %v408 = vmul.f32 %v236, 1.442695
    %v409 = vpow.pop %v408
    %v410 = vmul.f32 %v237, 1.442695
    %v411 = vpow.pop %v410
    %v412 = vmul.f32 %v238, 1.442695
    %v413 = vpow.pop %v412
    %v414 = vmul.f32 %v239, 1.442695
    %v415 = vpow.pop %v414
    %v416 = vmul.f32 %v240, 1.442695
    %v417 = vpow.pop %v416
    %v418 = vmul.f32 %v241, 1.442695
    %v419 = vpow.pop %v418
    %v420 = vmul.f32 %v242, 1.442695
    %v421 = vpow.pop %v420
    %v422 = vmul.f32 %v243, 1.442695
    %v423 = vpow.pop %v422
    %v424 = vmul.f32 %v244, 1.442695
    %v425 = vpow.pop %v424
    %v426 = vmul.f32 %v245, 1.442695
    %v427 = vpow.pop %v426
    %v428 = vmul.f32 %v246, 1.442695
    %v429 = vpow.pop %v428
    %v430 = vmul.f32 %v247, 1.442695
    %v431 = vpow.pop %v430
    %v432 = vmul.f32 %v248, 1.442695
    %v433 = vpow.pop %v432
    %v434 = vmul.f32 %v249, 1.442695
    %v435 = vpow.pop %v434
    %v436 = vmul.f32 %v250, 1.442695
    %v437 = vpow.pop %v436
    %v438 = vmul.f32 %v251, 1.442695
    %v439 = vpow.pop %v438
    %v440 = vmul.f32 %v252, 1.442695
    %v441 = vpow.pop %v440
    %v442 = vmul.f32 %v253, 1.442695
    %v443 = vpow.pop %v442
    %v444 = vmul.f32 %v254, 1.442695
    %v445 = vpow.pop %v444
    %v446 = vmul.f32 %v255, 1.442695
    %v447 = vpow.pop %v446
    %v448 = vmul.f32 %v256, 1.442695
    %v449 = vpow.pop %v448
    %v450 = vmul.f32 %v257, 1.442695
    %v451 = vpow.pop %v450
    %v452 = vmul.f32 %v258, 1.442695
    %v453 = vpow.pop %v452
    %v454 = vmul.f32 %v259, 1.442695
    %v455 = vpow.pop %v454
    %v456 = vmul.f32 %v260, 1.442695
    %v457 = vpow.pop %v456
    %v458 = vmul.f32 %v261, 1.442695
    %v459 = vpow.pop %v458
    %v460 = vmul.f32 %v262, 1.442695
    %v461 = vpow.pop %v460
    %v462 = vmul.f32 %v263, 1.442695
    %v463 = vpow.pop %v462
    %v464 = vmul.f32 %v264, 1.442695
    %v465 = vpow.pop %v464
    %v466 = vmul.f32 %v265, 1.442695
    %v467 = vpow.pop %v466
    %v468 = vmul.f32 %v266, 1.442695
    %v469 = vpow.pop %v468
    %v470 = vmul.f32 %v267, 1.442695
    %v471 = vpow.pop %v470
    %v472 = vmul.f32 %v268, 1.442695
    %v473 = vpow.pop %v472
    %v474 = vmul.f32 %v269, 1.442695
    %v475 = vpow.pop %v474
    %v476 = vmul.f32 %v270, 1.442695
    %v477 = vpow.pop %v476
    %v478 = vmul.f32 %v271, 1.442695
    %v479 = vpow.pop %v478
    %v480 = vmul.f32 %v272, 1.442695
    %v481 = vpow.pop %v480
    %v482 = vmul.f32 %v273, 1.442695
    %v483 = vpow.pop %v482
    %v484 = vmul.f32 %v274, 1.442695
    %v485 = vpow.pop %v484
    %v486 = vmul.f32 %v275, 1.442695
    %v487 = vpow.pop %v486
    %v488 = vmul.f32 %v276, 1.442695
    %v489 = vpow.pop %v488
    %v490 = vmul.f32 %v277, 1.442695
    %v491 = vpow.pop %v490
    %v492 = vmul.f32 %v278, 1.442695
    %v493 = vpow.pop %v492
    %v494 = vmul.f32 %v279, 1.442695
    %v495 = vpow.pop %v494
    %v496 = vmul.f32 %v280, 1.442695
    %v497 = vpow.pop %v496
    %v498 = vmul.f32 %v281, 1.442695
    %v499 = vpow.pop %v498
    %v500 = vmul.f32 %v282, 1.442695
    %v501 = vpow.pop %v500
    %v502 = vmul.f32 %v283, 1.442695
    %v503 = vpow.pop %v502
    %v504 = vmul.f32 %v284, 1.442695
    %v505 = vpow.pop %v504
    %v506 = vmul.f32 %v285, 1.442695
    %v507 = vpow.pop %v506
    %v508 = vmul.f32 %v286, 1.442695
    %v509 = vpow.pop %v508
    %v510 = vmul.f32 %v287, 1.442695
    %v511 = vpow.pop %v510
    %v512 = vmul.f32 %v288, 1.442695
    %v513 = vpow.pop %v512
    %v514 = vmul.f32 %v289, 1.442695
    %v515 = vpow.pop %v514
    %v516 = vmul.f32 %v290, 1.442695
    %v517 = vpow.pop %v516
    %v518 = vmul.f32 %v291, 1.442695
    %v519 = vpow.pop %v518
    %v520 = vmul.f32 %v292, 1.442695
    %v521 = vpow.pop %v520
    %v522 = vmul.f32 %v293, 1.442695
    %v523 = vpow.pop %v522
    %v524 = vmul.f32 %v294, 1.442695
    %v525 = vpow.pop %v524
    %v526 = vmul.f32 %v295, 1.442695
    %v527 = vpow.pop %v526
    %v528 = vmul.f32 %v296, 1.442695
    %v529 = vpow.pop %v528
    %v530 = vmul.f32 %v297, 1.442695
    %v531 = vpow.pop %v530
    %v532 = vmul.f32 %v298, 1.442695
    %v533 = vpow.pop %v532
    %v534 = vmul.f32 %v299, 1.442695
    %v535 = vpow.pop %v534
    %v536 = vmul.f32 %v300, 1.442695
    %v537 = vpow.pop %v536
    %v538 = vmul.f32 %v301, 1.442695
    %v539 = vpow.pop %v538
    %v540 = vmul.f32 %v302, 1.442695
    %v541 = vpow.pop %v540
    %v542 = vmul.f32 %v303, 1.442695
    %v543 = vpow.pop %v542
    %v544 = vmul.f32 %v304, 1.442695
    %v545 = vpow.pop %v544
    %v546 = vmul.f32 %v305, 1.442695
    %v547 = vpow.pop %v546
    %v548 = vmul.f32 %v306, 1.442695
    %v549 = vpow.pop %v548
    %v550 = vmul.f32 %v307, 1.442695
    %v551 = vpow.pop %v550
    %v552 = vmul.f32 %v308, 1.442695
    %v553 = vpow.pop %v552
    %v554 = vmul.f32 %v309, 1.442695
    %v555 = vpow.pop %v554
    %v556 = vmul.f32 %v310, 1.442695
    %v557 = vpow.pop %v556
    %v558 = vmul.f32 %v311, 1.442695
    %v559 = vpow.pop %v558
    %v560 = vmul.f32 %v312, 1.442695
    %v561 = vpow.pop %v560
    %v562 = vmul.f32 %v313, 1.442695
    %v563 = vpow.pop %v562
    %v564 = vmul.f32 %v314, 1.442695
    %v565 = vpow.pop %v564
    %v566 = vmul.f32 %v315, 1.442695
    %v567 = vpow.pop %v566
    %v568 = vmul.f32 %v316, 1.442695
    %v569 = vpow.pop %v568
    %v570 = vmul.f32 %v317, 1.442695
    %v571 = vpow.pop %v570
    %v572 = vmul.f32 %v318, 1.442695
    %v573 = vpow.pop %v572
    %v574 = vmul.f32 %v319, 1.442695
    %v575 = vpow.pop %v574
    %v576 = vmul.f32 %v321, %v49
    %v577 = vmul.f32 %v323, %v50
    %v578 = vmul.f32 %v325, %v51
    %v579 = vmul.f32 %v327, %v52
    %v580 = vmul.f32 %v329, %v53
    %v581 = vmul.f32 %v331, %v54
    %v582 = vmul.f32 %v333, %v55
    %v583 = vmul.f32 %v335, %v56
    %v584 = vmul.f32 %v337, %v57
    %v585 = vmul.f32 %v339, %v58
    %v586 = vmul.f32 %v341, %v59
    %v587 = vmul.f32 %v343, %v60
    %v588 = vmul.f32 %v345, %v61
    %v589 = vmul.f32 %v347, %v62
    %v590 = vmul.f32 %v349, %v63
    %v591 = vmul.f32 %v351, %v64
    %v592 = vmul.f32 %v353, %v49
    %v593 = vmul.f32 %v355, %v50
    %v594 = vmul.f32 %v357, %v51
    %v595 = vmul.f32 %v359, %v52
    %v596 = vmul.f32 %v361, %v53
    %v597 = vmul.f32 %v363, %v54
    %v598 = vmul.f32 %v365, %v55
    %v599 = vmul.f32 %v367, %v56
    %v600 = vmul.f32 %v369, %v57
    %v601 = vmul.f32 %v371, %v58
    %v602 = vmul.f32 %v373, %v59
    %v603 = vmul.f32 %v375, %v60
    %v604 = vmul.f32 %v377, %v61
    %v605 = vmul.f32 %v379, %v62
    %v606 = vmul.f32 %v381, %v63
    %v607 = vmul.f32 %v383, %v64
    %v608 = vmul.f32 %v385, %v49
    %v609 = vmul.f32 %v387, %v50
    %v610 = vmul.f32 %v389, %v51
    %v611 = vmul.f32 %v391, %v52
    %v612 = vmul.f32 %v393, %v53
    %v613 = vmul.f32 %v395, %v54
    %v614 = vmul.f32 %v397, %v55
    %v615 = vmul.f32 %v399, %v56
    %v616 = vmul.f32 %v401, %v57
    %v617 = vmul.f32 %v403, %v58
    %v618 = vmul.f32 %v405, %v59
    %v619 = vmul.f32 %v407, %v60
    %v620 = vmul.f32 %v409, %v61
    %v621 = vmul.f32 %v411, %v62
    %v622 = vmul.f32 %v413, %v63
    %v623 = vmul.f32 %v415, %v64
    %v624 = vmul.f32 %v417, %v49
    %v625 = vmul.f32 %v419, %v50
    %v626 = vmul.f32 %v421, %v51
    %v627 = vmul.f32 %v423, %v52
    %v628 = vmul.f32 %v425, %v53
    %v629 = vmul.f32 %v427, %v54
    %v630 = vmul.f32 %v429, %v55
    %v631 = vmul.f32 %v431, %v56
    %v632 = vmul.f32 %v433, %v57
    %v633 = vmul.f32 %v435, %v58
    %v634 = vmul.f32 %v437, %v59
    %v635 = vmul.f32 %v439, %v60
    %v636 = vmul.f32 %v441, %v61
    %v637 = vmul.f32 %v443, %v62
    %v638 = vmul.f32 %v445, %v63
    %v639 = vmul.f32 %v447, %v64
    %v640 = vmul.f32 %v449, %v49
    %v641 = vmul.f32 %v451, %v50
    %v642 = vmul.f32 %v453, %v51
    %v643 = vmul.f32 %v455, %v52
    %v644 = vmul.f32 %v457, %v53
    %v645 = vmul.f32 %v459, %v54
    %v646 = vmul.f32 %v461, %v55
    %v647 = vmul.f32 %v463, %v56
    %v648 = vmul.f32 %v465, %v57
    %v649 = vmul.f32 %v467, %v58
    %v650 = vmul.f32 %v469, %v59
    %v651 = vmul.f32 %v471, %v60
    %v652 = vmul.f32 %v473, %v61
    %v653 = vmul.f32 %v475, %v62
    %v654 = vmul.f32 %v477, %v63
    %v655 = vmul.f32 %v479, %v64
    %v656 = vmul.f32 %v481, %v49
    %v657 = vmul.f32 %v483, %v50
    %v658 = vmul.f32 %v485, %v51
    %v659 = vmul.f32 %v487, %v52
    %v660 = vmul.f32 %v489, %v53
    %v661 = vmul.f32 %v491, %v54
    %v662 = vmul.f32 %v493, %v55
    %v663 = vmul.f32 %v495, %v56
    %v664 = vmul.f32 %v497, %v57
    %v665 = vmul.f32 %v499, %v58
    %v666 = vmul.f32 %v501, %v59
    %v667 = vmul.f32 %v503, %v60
    %v668 = vmul.f32 %v505, %v61
    %v669 = vmul.f32 %v507, %v62
    %v670 = vmul.f32 %v509, %v63
    %v671 = vmul.f32 %v511, %v64
    %v672 = vmul.f32 %v513, %v49
    %v673 = vmul.f32 %v515, %v50
    %v674 = vmul.f32 %v517, %v51
    %v675 = vmul.f32 %v519, %v52
    %v676 = vmul.f32 %v521, %v53
    %v677 = vmul.f32 %v523, %v54
    %v678 = vmul.f32 %v525, %v55
    %v679 = vmul.f32 %v527, %v56
    %v680 = vmul.f32 %v529, %v57
    %v681 = vmul.f32 %v531, %v58
    %v682 = vmul.f32 %v533, %v59
    %v683 = vmul.f32 %v535, %v60
    %v684 = vmul.f32 %v537, %v61
    %v685 = vmul.f32 %v539, %v62
    %v686 = vmul.f32 %v541, %v63
    %v687 = vmul.f32 %v543, %v64
    %v688 = vmul.f32 %v545, %v49
    %v689 = vmul.f32 %v547, %v50
    %v690 = vmul.f32 %v549, %v51
    %v691 = vmul.f32 %v551, %v52
    %v692 = vmul.f32 %v553, %v53
    %v693 = vmul.f32 %v555, %v54
    %v694 = vmul.f32 %v557, %v55
    %v695 = vmul.f32 %v559, %v56
    %v696 = vmul.f32 %v561, %v57
    %v697 = vmul.f32 %v563, %v58
    %v698 = vmul.f32 %v565, %v59
    %v699 = vmul.f32 %v567, %v60
    %v700 = vmul.f32 %v569, %v61
    %v701 = vmul.f32 %v571, %v62
    %v702 = vmul.f32 %v573, %v63
    %v703 = vmul.f32 %v575, %v64
    %v704 = vadd.f32 %v576, %v577
    %v705 = vadd.f32 %v704, %v578
    %v706 = vadd.f32 %v705, %v579
    %v707 = vadd.f32 %v706, %v580
    %v708 = vadd.f32 %v707, %v581
    %v709 = vadd.f32 %v708, %v582
    %v710 = vadd.f32 %v709, %v583
    %v711 = vadd.f32 %v710, %v584
    %v712 = vadd.f32 %v711, %v585
    %v713 = vadd.f32 %v712, %v586
    %v714 = vadd.f32 %v713, %v587
    %v715 = vadd.f32 %v714, %v588
    %v716 = vadd.f32 %v715, %v589
    %v717 = vadd.f32 %v716, %v590
    %v718 = vadd.f32 %v717, %v591
    %v719 = vrot.slane %v718, 4
    %v720 = vadd.f32 %v718, %v719
    %v721 = vrot.slane %v720, 2
    %v722 = vadd.f32 %v720, %v721
    %v723 = vrot.slane %v722, 1
    %v724 = vadd.f32 %v722, %v723
    %v725 = vadd.f32 %v592, %v593
    %v726 = vadd.f32 %v725, %v594
    %v727 = vadd.f32 %v726, %v595
    %v728 = vadd.f32 %v727, %v596
    %v729 = vadd.f32 %v728, %v597
    %v730 = vadd.f32 %v729, %v598
    %v731 = vadd.f32 %v730, %v599
    %v732 = vadd.f32 %v731, %v600
    %v733 = vadd.f32 %v732, %v601
    %v734 = vadd.f32 %v733, %v602
    %v735 = vadd.f32 %v734, %v603
    %v736 = vadd.f32 %v735, %v604
    %v737 = vadd.f32 %v736, %v605
    %v738 = vadd.f32 %v737, %v606
    %v739 = vadd.f32 %v738, %v607
    %v740 = vrot.slane %v739, 4
    %v741 = vadd.f32 %v739, %v740
    %v742 = vrot.slane %v741, 2
    %v743 = vadd.f32 %v741, %v742
    %v744 = vrot.slane %v743, 1
    %v745 = vadd.f32 %v743, %v744
    %v746 = vadd.f32 %v608, %v609
    %v747 = vadd.f32 %v746, %v610
    %v748 = vadd.f32 %v747, %v611
    %v749 = vadd.f32 %v748, %v612
    %v750 = vadd.f32 %v749, %v613
    %v751 = vadd.f32 %v750, %v614
    %v752 = vadd.f32 %v751, %v615
    %v753 = vadd.f32 %v752, %v616
    %v754 = vadd.f32 %v753, %v617
    %v755 = vadd.f32 %v754, %v618
    %v756 = vadd.f32 %v755, %v619
    %v757 = vadd.f32 %v756, %v620
    %v758 = vadd.f32 %v757, %v621
    %v759 = vadd.f32 %v758, %v622
    %v760 = vadd.f32 %v759, %v623
    %v761 = vrot.slane %v760, 4
    %v762 = vadd.f32 %v760, %v761
    %v763 = vrot.slane %v762, 2
    %v764 = vadd.f32 %v762, %v763
    %v765 = vrot.slane %v764, 1
    %v766 = vadd.f32 %v764, %v765
    %v767 = vadd.f32 %v624, %v625
    %v768 = vadd.f32 %v767, %v626
    %v769 = vadd.f32 %v768, %v627
    %v770 = vadd.f32 %v769, %v628
    %v771 = vadd.f32 %v770, %v629
    %v772 = vadd.f32 %v771, %v630
    %v773 = vadd.f32 %v772, %v631
    %v774 = vadd.f32 %v773, %v632
    %v775 = vadd.f32 %v774, %v633
    %v776 = vadd.f32 %v775, %v634
    %v777 = vadd.f32 %v776, %v635
    %v778 = vadd.f32 %v777, %v636
    %v779 = vadd.f32 %v778, %v637
    %v780 = vadd.f32 %v779, %v638
    %v781 = vadd.f32 %v780, %v639
    %v782 = vrot.slane %v781, 4
    %v783 = vadd.f32 %v781, %v782
    %v784 = vrot.slane %v783, 2
    %v785 = vadd.f32 %v783, %v784
    %v786 = vrot.slane %v785, 1
    %v787 = vadd.f32 %v785, %v786
    %v788 = vadd.f32 %v640, %v641
    %v789 = vadd.f32 %v788, %v642
    %v790 = vadd.f32 %v789, %v643
    %v791 = vadd.f32 %v790, %v644
    %v792 = vadd.f32 %v791, %v645
    %v793 = vadd.f32 %v792, %v646
    %v794 = vadd.f32 %v793, %v647
    %v795 = vadd.f32 %v794, %v648
    %v796 = vadd.f32 %v795, %v649
    %v797 = vadd.f32 %v796, %v650
    %v798 = vadd.f32 %v797, %v651
    %v799 = vadd.f32 %v798, %v652
    %v800 = vadd.f32 %v799, %v653
    %v801 = vadd.f32 %v800, %v654
    %v802 = vadd.f32 %v801, %v655
    %v803 = vrot.slane %v802, 4
    %v804 = vadd.f32 %v802, %v803
    %v805 = vrot.slane %v804, 2
    %v806 = vadd.f32 %v804, %v805
    %v807 = vrot.slane %v806, 1
    %v808 = vadd.f32 %v806, %v807
    %v809 = vadd.f32 %v656, %v657
    %v810 = vadd.f32 %v809, %v658
    %v811 = vadd.f32 %v810, %v659
    %v812 = vadd.f32 %v811, %v660
    %v813 = vadd.f32 %v812, %v661
    %v814 = vadd.f32 %v813, %v662
    %v815 = vadd.f32 %v814, %v663
    %v816 = vadd.f32 %v815, %v664
    %v817 = vadd.f32 %v816, %v665
    %v818 = vadd.f32 %v817, %v666
    %v819 = vadd.f32 %v818, %v667
    %v820 = vadd.f32 %v819, %v668
    %v821 = vadd.f32 %v820, %v669
    %v822 = vadd.f32 %v821, %v670
    %v823 = vadd.f32 %v822, %v671
    %v824 = vrot.slane %v823, 4
    %v825 = vadd.f32 %v823, %v824
    %v826 = vrot.slane %v825, 2
    %v827 = vadd.f32 %v825, %v826
    %v828 = vrot.slane %v827, 1
    %v829 = vadd.f32 %v827, %v828
    %v830 = vadd.f32 %v672, %v673
    %v831 = vadd.f32 %v830, %v674
    %v832 = vadd.f32 %v831, %v675
    %v833 = vadd.f32 %v832, %v676
    %v834 = vadd.f32 %v833, %v677
    %v835 = vadd.f32 %v834, %v678
    %v836 = vadd.f32 %v835, %v679
    %v837 = vadd.f32 %v836, %v680
    %v838 = vadd.f32 %v837, %v681
    %v839 = vadd.f32 %v838, %v682
    %v840 = vadd.f32 %v839, %v683
    %v841 = vadd.f32 %v840, %v684
    %v842 = vadd.f32 %v841, %v685
    %v843 = vadd.f32 %v842, %v686
    %v844 = vadd.f32 %v843, %v687
    %v845 = vrot.slane %v844, 4
    %v846 = vadd.f32 %v844, %v845
    %v847 = vrot.slane %v846, 2
    %v848 = vadd.f32 %v846, %v847
    %v849 = vrot.slane %v848, 1
    %v850 = vadd.f32 %v848, %v849
    %v851 = vadd.f32 %v688, %v689
    %v852 = vadd.f32 %v851, %v690
    %v853 = vadd.f32 %v852, %v691
    %v854 = vadd.f32 %v853, %v692
    %v855 = vadd.f32 %v854, %v693
    %v856 = vadd.f32 %v855, %v694
    %v857 = vadd.f32 %v856, %v695
    %v858 = vadd.f32 %v857, %v696
    %v859 = vadd.f32 %v858, %v697
    %v860 = vadd.f32 %v859, %v698
    %v861 = vadd.f32 %v860, %v699
    %v862 = vadd.f32 %v861, %v700
    %v863 = vadd.f32 %v862, %v701
    %v864 = vadd.f32 %v863, %v702
    %v865 = vadd.f32 %v864, %v703
    %v866 = vrot.slane %v865, 4
    %v867 = vadd.f32 %v865, %v866
    %v868 = vrot.slane %v867, 2
    %v869 = vadd.f32 %v867, %v868
    %v870 = vrot.slane %v869, 1
    %v871 = vadd.f32 %v869, %v870
    %vm880 = vcmask 1041409
    %v881 = vsel %vm880, %v745, %v724
    %vm882 = vcmask 1042434
    %v883 = vsel %vm882, %v766, %v881
    %vm884 = vcmask 1043459
    %v885 = vsel %vm884, %v787, %v883
    %vm886 = vcmask 1044484
    %v887 = vsel %vm886, %v808, %v885
    %vm888 = vcmask 1045509
    %v889 = vsel %vm888, %v829, %v887
    %vm890 = vcmask 1046534
    %v891 = vsel %vm890, %v850, %v889
    %vm892 = vcmask 1047559
    %v893 = vsel %vm892, %v871, %v891
    %895 = vst [vmem:[#allocation6] sm:$0xff] %v893
    %v896 = vmul.f32 %v321, %v321
    %v897 = vmul.f32 %v323, %v323
    %v898 = vmul.f32 %v325, %v325
    %v899 = vmul.f32 %v327, %v327
    %v900 = vmul.f32 %v329, %v329
    %v901 = vmul.f32 %v331, %v331
    %v902 = vmul.f32 %v333, %v333
    %v903 = vmul.f32 %v335, %v335
    %v904 = vmul.f32 %v337, %v337
    %v905 = vmul.f32 %v339, %v339
    %v906 = vmul.f32 %v341, %v341
    %v907 = vmul.f32 %v343, %v343
    %v908 = vmul.f32 %v345, %v345
    %v909 = vmul.f32 %v347, %v347
    %v910 = vmul.f32 %v349, %v349
    %v911 = vmul.f32 %v351, %v351
    %v912 = vmul.f32 %v353, %v321
    %v913 = vmul.f32 %v355, %v323
    %v914 = vmul.f32 %v357, %v325
    %v915 = vmul.f32 %v359, %v327
    %v916 = vmul.f32 %v361, %v329
    %v917 = vmul.f32 %v363, %v331
    %v918 = vmul.f32 %v365, %v333
    %v919 = vmul.f32 %v367, %v335
    %v920 = vmul.f32 %v369, %v337
    %v921 = vmul.f32 %v371, %v339
    %v922 = vmul.f32 %v373, %v341
    %v923 = vmul.f32 %v375, %v343
    %v924 = vmul.f32 %v377, %v345
    %v925 = vmul.f32 %v379, %v347
    %v926 = vmul.f32 %v381, %v349
    %v927 = vmul.f32 %v383, %v351
    %v928 = vmul.f32 %v385, %v321
    %v929 = vmul.f32 %v387, %v323
    %v930 = vmul.f32 %v389, %v325
    %v931 = vmul.f32 %v391, %v327
    %v932 = vmul.f32 %v393, %v329
    %v933 = vmul.f32 %v395, %v331
    %v934 = vmul.f32 %v397, %v333
    %v935 = vmul.f32 %v399, %v335
    %v936 = vmul.f32 %v401, %v337
    %v937 = vmul.f32 %v403, %v339
    %v938 = vmul.f32 %v405, %v341
    %v939 = vmul.f32 %v407, %v343
    %v940 = vmul.f32 %v409, %v345
    %v941 = vmul.f32 %v411, %v347
    %v942 = vmul.f32 %v413, %v349
    %v943 = vmul.f32 %v415, %v351
    %v944 = vmul.f32 %v417, %v321
    %v945 = vmul.f32 %v419, %v323
    %v946 = vmul.f32 %v421, %v325
    %v947 = vmul.f32 %v423, %v327
    %v948 = vmul.f32 %v425, %v329
    %v949 = vmul.f32 %v427, %v331
    %v950 = vmul.f32 %v429, %v333
    %v951 = vmul.f32 %v431, %v335
    %v952 = vmul.f32 %v433, %v337
    %v953 = vmul.f32 %v435, %v339
    %v954 = vmul.f32 %v437, %v341
    %v955 = vmul.f32 %v439, %v343
    %v956 = vmul.f32 %v441, %v345
    %v957 = vmul.f32 %v443, %v347
    %v958 = vmul.f32 %v445, %v349
    %v959 = vmul.f32 %v447, %v351
    %v960 = vmul.f32 %v449, %v321
    %v961 = vmul.f32 %v451, %v323
    %v962 = vmul.f32 %v453, %v325
    %v963 = vmul.f32 %v455, %v327
    %v964 = vmul.f32 %v457, %v329
    %v965 = vmul.f32 %v459, %v331
    %v966 = vmul.f32 %v461, %v333
    %v967 = vmul.f32 %v463, %v335
    %v968 = vmul.f32 %v465, %v337
    %v969 = vmul.f32 %v467, %v339
    %v970 = vmul.f32 %v469, %v341
    %v971 = vmul.f32 %v471, %v343
    %v972 = vmul.f32 %v473, %v345
    %v973 = vmul.f32 %v475, %v347
    %v974 = vmul.f32 %v477, %v349
    %v975 = vmul.f32 %v479, %v351
    %v976 = vmul.f32 %v481, %v321
    %v977 = vmul.f32 %v483, %v323
    %v978 = vmul.f32 %v485, %v325
    %v979 = vmul.f32 %v487, %v327
    %v980 = vmul.f32 %v489, %v329
    %v981 = vmul.f32 %v491, %v331
    %v982 = vmul.f32 %v493, %v333
    %v983 = vmul.f32 %v495, %v335
    %v984 = vmul.f32 %v497, %v337
    %v985 = vmul.f32 %v499, %v339
    %v986 = vmul.f32 %v501, %v341
    %v987 = vmul.f32 %v503, %v343
    %v988 = vmul.f32 %v505, %v345
    %v989 = vmul.f32 %v507, %v347
    %v990 = vmul.f32 %v509, %v349
    %v991 = vmul.f32 %v511, %v351
    %v992 = vmul.f32 %v513, %v321
    %v993 = vmul.f32 %v515, %v323
    %v994 = vmul.f32 %v517, %v325
    %v995 = vmul.f32 %v519, %v327
    %v996 = vmul.f32 %v521, %v329
    %v997 = vmul.f32 %v523, %v331
    %v998 = vmul.f32 %v525, %v333
    %v999 = vmul.f32 %v527, %v335
    %v1000 = vmul.f32 %v529, %v337
    %v1001 = vmul.f32 %v531, %v339
    %v1002 = vmul.f32 %v533, %v341
    %v1003 = vmul.f32 %v535, %v343
    %v1004 = vmul.f32 %v537, %v345
    %v1005 = vmul.f32 %v539, %v347
    %v1006 = vmul.f32 %v541, %v349
    %v1007 = vmul.f32 %v543, %v351
    %v1008 = vmul.f32 %v545, %v321
    %v1009 = vmul.f32 %v547, %v323
    %v1010 = vmul.f32 %v549, %v325
    %v1011 = vmul.f32 %v551, %v327
    %v1012 = vmul.f32 %v553, %v329
    %v1013 = vmul.f32 %v555, %v331
    %v1014 = vmul.f32 %v557, %v333
    %v1015 = vmul.f32 %v559, %v335
    %v1016 = vmul.f32 %v561, %v337
    %v1017 = vmul.f32 %v563, %v339
    %v1018 = vmul.f32 %v565, %v341
    %v1019 = vmul.f32 %v567, %v343
    %v1020 = vmul.f32 %v569, %v345
    %v1021 = vmul.f32 %v571, %v347
    %v1022 = vmul.f32 %v573, %v349
    %v1023 = vmul.f32 %v575, %v351
    %v1024 = vadd.f32 %v896, %v897
    %v1025 = vadd.f32 %v1024, %v898
    %v1026 = vadd.f32 %v1025, %v899
    %v1027 = vadd.f32 %v1026, %v900
    %v1028 = vadd.f32 %v1027, %v901
    %v1029 = vadd.f32 %v1028, %v902
    %v1030 = vadd.f32 %v1029, %v903
    %v1031 = vadd.f32 %v1030, %v904
    %v1032 = vadd.f32 %v1031, %v905
    %v1033 = vadd.f32 %v1032, %v906
    %v1034 = vadd.f32 %v1033, %v907
    %v1035 = vadd.f32 %v1034, %v908
    %v1036 = vadd.f32 %v1035, %v909
    %v1037 = vadd.f32 %v1036, %v910
    %v1038 = vadd.f32 %v1037, %v911
    %v1039 = vrot.slane %v1038, 4
    %v1040 = vadd.f32 %v1038, %v1039
    %v1041 = vrot.slane %v1040, 2
    %v1042 = vadd.f32 %v1040, %v1041
    %v1043 = vrot.slane %v1042, 1
    %v1044 = vadd.f32 %v1042, %v1043
    %v1045 = vadd.f32 %v912, %v913
    %v1046 = vadd.f32 %v1045, %v914
    %v1047 = vadd.f32 %v1046, %v915
    %v1048 = vadd.f32 %v1047, %v916
    %v1049 = vadd.f32 %v1048, %v917
    %v1050 = vadd.f32 %v1049, %v918
    %v1051 = vadd.f32 %v1050, %v919
    %v1052 = vadd.f32 %v1051, %v920
    %v1053 = vadd.f32 %v1052, %v921
    %v1054 = vadd.f32 %v1053, %v922
    %v1055 = vadd.f32 %v1054, %v923
    %v1056 = vadd.f32 %v1055, %v924
    %v1057 = vadd.f32 %v1056, %v925
    %v1058 = vadd.f32 %v1057, %v926
    %v1059 = vadd.f32 %v1058, %v927
    %v1060 = vrot.slane %v1059, 4
    %v1061 = vadd.f32 %v1059, %v1060
    %v1062 = vrot.slane %v1061, 2
    %v1063 = vadd.f32 %v1061, %v1062
    %v1064 = vrot.slane %v1063, 1
    %v1065 = vadd.f32 %v1063, %v1064
    %v1066 = vadd.f32 %v928, %v929
    %v1067 = vadd.f32 %v1066, %v930
    %v1068 = vadd.f32 %v1067, %v931
    %v1069 = vadd.f32 %v1068, %v932
    %v1070 = vadd.f32 %v1069, %v933
    %v1071 = vadd.f32 %v1070, %v934
    %v1072 = vadd.f32 %v1071, %v935
    %v1073 = vadd.f32 %v1072, %v936
    %v1074 = vadd.f32 %v1073, %v937
    %v1075 = vadd.f32 %v1074, %v938
    %v1076 = vadd.f32 %v1075, %v939
    %v1077 = vadd.f32 %v1076, %v940
    %v1078 = vadd.f32 %v1077, %v941
    %v1079 = vadd.f32 %v1078, %v942
    %v1080 = vadd.f32 %v1079, %v943
    %v1081 = vrot.slane %v1080, 4
    %v1082 = vadd.f32 %v1080, %v1081
    %v1083 = vrot.slane %v1082, 2
    %v1084 = vadd.f32 %v1082, %v1083
    %v1085 = vrot.slane %v1084, 1
    %v1086 = vadd.f32 %v1084, %v1085
    %v1087 = vadd.f32 %v944, %v945
    %v1088 = vadd.f32 %v1087, %v946
    %v1089 = vadd.f32 %v1088, %v947
    %v1090 = vadd.f32 %v1089, %v948
    %v1091 = vadd.f32 %v1090, %v949
    %v1092 = vadd.f32 %v1091, %v950
    %v1093 = vadd.f32 %v1092, %v951
    %v1094 = vadd.f32 %v1093, %v952
    %v1095 = vadd.f32 %v1094, %v953
    %v1096 = vadd.f32 %v1095, %v954
    %v1097 = vadd.f32 %v1096, %v955
    %v1098 = vadd.f32 %v1097, %v956
    %v1099 = vadd.f32 %v1098, %v957
    %v1100 = vadd.f32 %v1099, %v958
    %v1101 = vadd.f32 %v1100, %v959
    %v1102 = vrot.slane %v1101, 4
    %v1103 = vadd.f32 %v1101, %v1102
    %v1104 = vrot.slane %v1103, 2
    %v1105 = vadd.f32 %v1103, %v1104
    %v1106 = vrot.slane %v1105, 1
    %v1107 = vadd.f32 %v1105, %v1106
    %v1108 = vadd.f32 %v960, %v961
    %v1109 = vadd.f32 %v1108, %v962
    %v1110 = vadd.f32 %v1109, %v963
    %v1111 = vadd.f32 %v1110, %v964
    %v1112 = vadd.f32 %v1111, %v965
    %v1113 = vadd.f32 %v1112, %v966
    %v1114 = vadd.f32 %v1113, %v967
    %v1115 = vadd.f32 %v1114, %v968
    %v1116 = vadd.f32 %v1115, %v969
    %v1117 = vadd.f32 %v1116, %v970
    %v1118 = vadd.f32 %v1117, %v971
    %v1119 = vadd.f32 %v1118, %v972
    %v1120 = vadd.f32 %v1119, %v973
    %v1121 = vadd.f32 %v1120, %v974
    %v1122 = vadd.f32 %v1121, %v975
    %v1123 = vrot.slane %v1122, 4
    %v1124 = vadd.f32 %v1122, %v1123
    %v1125 = vrot.slane %v1124, 2
    %v1126 = vadd.f32 %v1124, %v1125
    %v1127 = vrot.slane %v1126, 1
    %v1128 = vadd.f32 %v1126, %v1127
    %v1129 = vadd.f32 %v976, %v977
    %v1130 = vadd.f32 %v1129, %v978
    %v1131 = vadd.f32 %v1130, %v979
    %v1132 = vadd.f32 %v1131, %v980
    %v1133 = vadd.f32 %v1132, %v981
    %v1134 = vadd.f32 %v1133, %v982
    %v1135 = vadd.f32 %v1134, %v983
    %v1136 = vadd.f32 %v1135, %v984
    %v1137 = vadd.f32 %v1136, %v985
    %v1138 = vadd.f32 %v1137, %v986
    %v1139 = vadd.f32 %v1138, %v987
    %v1140 = vadd.f32 %v1139, %v988
    %v1141 = vadd.f32 %v1140, %v989
    %v1142 = vadd.f32 %v1141, %v990
    %v1143 = vadd.f32 %v1142, %v991
    %v1144 = vrot.slane %v1143, 4
    %v1145 = vadd.f32 %v1143, %v1144
    %v1146 = vrot.slane %v1145, 2
    %v1147 = vadd.f32 %v1145, %v1146
    %v1148 = vrot.slane %v1147, 1
    %v1149 = vadd.f32 %v1147, %v1148
    %v1150 = vadd.f32 %v992, %v993
    %v1151 = vadd.f32 %v1150, %v994
    %v1152 = vadd.f32 %v1151, %v995
    %v1153 = vadd.f32 %v1152, %v996
    %v1154 = vadd.f32 %v1153, %v997
    %v1155 = vadd.f32 %v1154, %v998
    %v1156 = vadd.f32 %v1155, %v999
    %v1157 = vadd.f32 %v1156, %v1000
    %v1158 = vadd.f32 %v1157, %v1001
    %v1159 = vadd.f32 %v1158, %v1002
    %v1160 = vadd.f32 %v1159, %v1003
    %v1161 = vadd.f32 %v1160, %v1004
    %v1162 = vadd.f32 %v1161, %v1005
    %v1163 = vadd.f32 %v1162, %v1006
    %v1164 = vadd.f32 %v1163, %v1007
    %v1165 = vrot.slane %v1164, 4
    %v1166 = vadd.f32 %v1164, %v1165
    %v1167 = vrot.slane %v1166, 2
    %v1168 = vadd.f32 %v1166, %v1167
    %v1169 = vrot.slane %v1168, 1
    %v1170 = vadd.f32 %v1168, %v1169
    %v1171 = vadd.f32 %v1008, %v1009
    %v1172 = vadd.f32 %v1171, %v1010
    %v1173 = vadd.f32 %v1172, %v1011
    %v1174 = vadd.f32 %v1173, %v1012
    %v1175 = vadd.f32 %v1174, %v1013
    %v1176 = vadd.f32 %v1175, %v1014
    %v1177 = vadd.f32 %v1176, %v1015
    %v1178 = vadd.f32 %v1177, %v1016
    %v1179 = vadd.f32 %v1178, %v1017
    %v1180 = vadd.f32 %v1179, %v1018
    %v1181 = vadd.f32 %v1180, %v1019
    %v1182 = vadd.f32 %v1181, %v1020
    %v1183 = vadd.f32 %v1182, %v1021
    %v1184 = vadd.f32 %v1183, %v1022
    %v1185 = vadd.f32 %v1184, %v1023
    %v1186 = vrot.slane %v1185, 4
    %v1187 = vadd.f32 %v1185, %v1186
    %v1188 = vrot.slane %v1187, 2
    %v1189 = vadd.f32 %v1187, %v1188
    %v1190 = vrot.slane %v1189, 1
    %v1191 = vadd.f32 %v1189, %v1190
    %v1200 = vsel %vm880, %v1065, %v1044
    %v1201 = vsel %vm882, %v1086, %v1200
    %v1202 = vsel %vm884, %v1107, %v1201
    %v1203 = vsel %vm886, %v1128, %v1202
    %v1204 = vsel %vm888, %v1149, %v1203
    %v1205 = vsel %vm890, %v1170, %v1204
    %v1206 = vsel %vm892, %v1191, %v1205
    %1208 = vst [vmem:[#allocation5] sm:$0xff] %v1206
    %v1209 = vmul.f32 %v353, %v353
    %v1210 = vmul.f32 %v355, %v355
    %v1211 = vmul.f32 %v357, %v357
    %v1212 = vmul.f32 %v359, %v359
    %v1213 = vmul.f32 %v361, %v361
    %v1214 = vmul.f32 %v363, %v363
    %v1215 = vmul.f32 %v365, %v365
    %v1216 = vmul.f32 %v367, %v367
    %v1217 = vmul.f32 %v369, %v369
    %v1218 = vmul.f32 %v371, %v371
    %v1219 = vmul.f32 %v373, %v373
    %v1220 = vmul.f32 %v375, %v375
    %v1221 = vmul.f32 %v377, %v377
    %v1222 = vmul.f32 %v379, %v379
    %v1223 = vmul.f32 %v381, %v381
    %v1224 = vmul.f32 %v383, %v383
    %v1225 = vmul.f32 %v385, %v353
    %v1226 = vmul.f32 %v387, %v355
    %v1227 = vmul.f32 %v389, %v357
    %v1228 = vmul.f32 %v391, %v359
    %v1229 = vmul.f32 %v393, %v361
    %v1230 = vmul.f32 %v395, %v363
    %v1231 = vmul.f32 %v397, %v365
    %v1232 = vmul.f32 %v399, %v367
    %v1233 = vmul.f32 %v401, %v369
    %v1234 = vmul.f32 %v403, %v371
    %v1235 = vmul.f32 %v405, %v373
    %v1236 = vmul.f32 %v407, %v375
    %v1237 = vmul.f32 %v409, %v377
    %v1238 = vmul.f32 %v411, %v379
    %v1239 = vmul.f32 %v413, %v381
    %v1240 = vmul.f32 %v415, %v383
    %v1241 = vmul.f32 %v417, %v353
    %v1242 = vmul.f32 %v419, %v355
    %v1243 = vmul.f32 %v421, %v357
    %v1244 = vmul.f32 %v423, %v359
    %v1245 = vmul.f32 %v425, %v361
    %v1246 = vmul.f32 %v427, %v363
    %v1247 = vmul.f32 %v429, %v365
    %v1248 = vmul.f32 %v431, %v367
    %v1249 = vmul.f32 %v433, %v369
    %v1250 = vmul.f32 %v435, %v371
    %v1251 = vmul.f32 %v437, %v373
    %v1252 = vmul.f32 %v439, %v375
    %v1253 = vmul.f32 %v441, %v377
    %v1254 = vmul.f32 %v443, %v379
    %v1255 = vmul.f32 %v445, %v381
    %v1256 = vmul.f32 %v447, %v383
    %v1257 = vmul.f32 %v449, %v353
    %v1258 = vmul.f32 %v451, %v355
    %v1259 = vmul.f32 %v453, %v357
    %v1260 = vmul.f32 %v455, %v359
    %v1261 = vmul.f32 %v457, %v361
    %v1262 = vmul.f32 %v459, %v363
    %v1263 = vmul.f32 %v461, %v365
    %v1264 = vmul.f32 %v463, %v367
    %v1265 = vmul.f32 %v465, %v369
    %v1266 = vmul.f32 %v467, %v371
    %v1267 = vmul.f32 %v469, %v373
    %v1268 = vmul.f32 %v471, %v375
    %v1269 = vmul.f32 %v473, %v377
    %v1270 = vmul.f32 %v475, %v379
    %v1271 = vmul.f32 %v477, %v381
    %v1272 = vmul.f32 %v479, %v383
    %v1273 = vmul.f32 %v481, %v353
    %v1274 = vmul.f32 %v483, %v355
    %v1275 = vmul.f32 %v485, %v357
    %v1276 = vmul.f32 %v487, %v359
    %v1277 = vmul.f32 %v489, %v361
    %v1278 = vmul.f32 %v491, %v363
    %v1279 = vmul.f32 %v493, %v365
    %v1280 = vmul.f32 %v495, %v367
    %v1281 = vmul.f32 %v497, %v369
    %v1282 = vmul.f32 %v499, %v371
    %v1283 = vmul.f32 %v501, %v373
    %v1284 = vmul.f32 %v503, %v375
    %v1285 = vmul.f32 %v505, %v377
    %v1286 = vmul.f32 %v507, %v379
    %v1287 = vmul.f32 %v509, %v381
    %v1288 = vmul.f32 %v511, %v383
    %v1289 = vmul.f32 %v513, %v353
    %v1290 = vmul.f32 %v515, %v355
    %v1291 = vmul.f32 %v517, %v357
    %v1292 = vmul.f32 %v519, %v359
    %v1293 = vmul.f32 %v521, %v361
    %v1294 = vmul.f32 %v523, %v363
    %v1295 = vmul.f32 %v525, %v365
    %v1296 = vmul.f32 %v527, %v367
    %v1297 = vmul.f32 %v529, %v369
    %v1298 = vmul.f32 %v531, %v371
    %v1299 = vmul.f32 %v533, %v373
    %v1300 = vmul.f32 %v535, %v375
    %v1301 = vmul.f32 %v537, %v377
    %v1302 = vmul.f32 %v539, %v379
    %v1303 = vmul.f32 %v541, %v381
    %v1304 = vmul.f32 %v543, %v383
    %v1305 = vmul.f32 %v545, %v353
    %v1306 = vmul.f32 %v547, %v355
    %v1307 = vmul.f32 %v549, %v357
    %v1308 = vmul.f32 %v551, %v359
    %v1309 = vmul.f32 %v553, %v361
    %v1310 = vmul.f32 %v555, %v363
    %v1311 = vmul.f32 %v557, %v365
    %v1312 = vmul.f32 %v559, %v367
    %v1313 = vmul.f32 %v561, %v369
    %v1314 = vmul.f32 %v563, %v371
    %v1315 = vmul.f32 %v565, %v373
    %v1316 = vmul.f32 %v567, %v375
    %v1317 = vmul.f32 %v569, %v377
    %v1318 = vmul.f32 %v571, %v379
    %v1319 = vmul.f32 %v573, %v381
    %v1320 = vmul.f32 %v575, %v383
    %v1321 = vadd.f32 %v1209, %v1210
    %v1322 = vadd.f32 %v1321, %v1211
    %v1323 = vadd.f32 %v1322, %v1212
    %v1324 = vadd.f32 %v1323, %v1213
    %v1325 = vadd.f32 %v1324, %v1214
    %v1326 = vadd.f32 %v1325, %v1215
    %v1327 = vadd.f32 %v1326, %v1216
    %v1328 = vadd.f32 %v1327, %v1217
    %v1329 = vadd.f32 %v1328, %v1218
    %v1330 = vadd.f32 %v1329, %v1219
    %v1331 = vadd.f32 %v1330, %v1220
    %v1332 = vadd.f32 %v1331, %v1221
    %v1333 = vadd.f32 %v1332, %v1222
    %v1334 = vadd.f32 %v1333, %v1223
    %v1335 = vadd.f32 %v1334, %v1224
    %v1336 = vrot.slane %v1335, 4
    %v1337 = vadd.f32 %v1335, %v1336
    %v1338 = vrot.slane %v1337, 2
    %v1339 = vadd.f32 %v1337, %v1338
    %v1340 = vrot.slane %v1339, 1
    %v1341 = vadd.f32 %v1339, %v1340
    %v1342 = vadd.f32 %v1225, %v1226
    %v1343 = vadd.f32 %v1342, %v1227
    %v1344 = vadd.f32 %v1343, %v1228
    %v1345 = vadd.f32 %v1344, %v1229
    %v1346 = vadd.f32 %v1345, %v1230
    %v1347 = vadd.f32 %v1346, %v1231
    %v1348 = vadd.f32 %v1347, %v1232
    %v1349 = vadd.f32 %v1348, %v1233
    %v1350 = vadd.f32 %v1349, %v1234
    %v1351 = vadd.f32 %v1350, %v1235
    %v1352 = vadd.f32 %v1351, %v1236
    %v1353 = vadd.f32 %v1352, %v1237
    %v1354 = vadd.f32 %v1353, %v1238
    %v1355 = vadd.f32 %v1354, %v1239
    %v1356 = vadd.f32 %v1355, %v1240
    %v1357 = vrot.slane %v1356, 4
    %v1358 = vadd.f32 %v1356, %v1357
    %v1359 = vrot.slane %v1358, 2
    %v1360 = vadd.f32 %v1358, %v1359
    %v1361 = vrot.slane %v1360, 1
    %v1362 = vadd.f32 %v1360, %v1361
    %v1363 = vadd.f32 %v1241, %v1242
    %v1364 = vadd.f32 %v1363, %v1243
    %v1365 = vadd.f32 %v1364, %v1244
    %v1366 = vadd.f32 %v1365, %v1245
    %v1367 = vadd.f32 %v1366, %v1246
    %v1368 = vadd.f32 %v1367, %v1247
    %v1369 = vadd.f32 %v1368, %v1248
    %v1370 = vadd.f32 %v1369, %v1249
    %v1371 = vadd.f32 %v1370, %v1250
    %v1372 = vadd.f32 %v1371, %v1251
    %v1373 = vadd.f32 %v1372, %v1252
    %v1374 = vadd.f32 %v1373, %v1253
    %v1375 = vadd.f32 %v1374, %v1254
    %v1376 = vadd.f32 %v1375, %v1255
    %v1377 = vadd.f32 %v1376, %v1256
    %v1378 = vrot.slane %v1377, 4
    %v1379 = vadd.f32 %v1377, %v1378
    %v1380 = vrot.slane %v1379, 2
    %v1381 = vadd.f32 %v1379, %v1380
    %v1382 = vrot.slane %v1381, 1
    %v1383 = vadd.f32 %v1381, %v1382
    %v1384 = vadd.f32 %v1257, %v1258
    %v1385 = vadd.f32 %v1384, %v1259
    %v1386 = vadd.f32 %v1385, %v1260
    %v1387 = vadd.f32 %v1386, %v1261
    %v1388 = vadd.f32 %v1387, %v1262
    %v1389 = vadd.f32 %v1388, %v1263
    %v1390 = vadd.f32 %v1389, %v1264
    %v1391 = vadd.f32 %v1390, %v1265
    %v1392 = vadd.f32 %v1391, %v1266
    %v1393 = vadd.f32 %v1392, %v1267
    %v1394 = vadd.f32 %v1393, %v1268
    %v1395 = vadd.f32 %v1394, %v1269
    %v1396 = vadd.f32 %v1395, %v1270
    %v1397 = vadd.f32 %v1396, %v1271
    %v1398 = vadd.f32 %v1397, %v1272
    %v1399 = vrot.slane %v1398, 4
    %v1400 = vadd.f32 %v1398, %v1399
    %v1401 = vrot.slane %v1400, 2
    %v1402 = vadd.f32 %v1400, %v1401
    %v1403 = vrot.slane %v1402, 1
    %v1404 = vadd.f32 %v1402, %v1403
    %v1405 = vadd.f32 %v1273, %v1274
    %v1406 = vadd.f32 %v1405, %v1275
    %v1407 = vadd.f32 %v1406, %v1276
    %v1408 = vadd.f32 %v1407, %v1277
    %v1409 = vadd.f32 %v1408, %v1278
    %v1410 = vadd.f32 %v1409, %v1279
    %v1411 = vadd.f32 %v1410, %v1280
    %v1412 = vadd.f32 %v1411, %v1281
    %v1413 = vadd.f32 %v1412, %v1282
    %v1414 = vadd.f32 %v1413, %v1283
    %v1415 = vadd.f32 %v1414, %v1284
    %v1416 = vadd.f32 %v1415, %v1285
    %v1417 = vadd.f32 %v1416, %v1286
    %v1418 = vadd.f32 %v1417, %v1287
    %v1419 = vadd.f32 %v1418, %v1288
    %v1420 = vrot.slane %v1419, 4
    %v1421 = vadd.f32 %v1419, %v1420
    %v1422 = vrot.slane %v1421, 2
    %v1423 = vadd.f32 %v1421, %v1422
    %v1424 = vrot.slane %v1423, 1
    %v1425 = vadd.f32 %v1423, %v1424
    %v1426 = vadd.f32 %v1289, %v1290
    %v1427 = vadd.f32 %v1426, %v1291
    %v1428 = vadd.f32 %v1427, %v1292
    %v1429 = vadd.f32 %v1428, %v1293
    %v1430 = vadd.f32 %v1429, %v1294
    %v1431 = vadd.f32 %v1430, %v1295
    %v1432 = vadd.f32 %v1431, %v1296
    %v1433 = vadd.f32 %v1432, %v1297
    %v1434 = vadd.f32 %v1433, %v1298
    %v1435 = vadd.f32 %v1434, %v1299
    %v1436 = vadd.f32 %v1435, %v1300
    %v1437 = vadd.f32 %v1436, %v1301
    %v1438 = vadd.f32 %v1437, %v1302
    %v1439 = vadd.f32 %v1438, %v1303
    %v1440 = vadd.f32 %v1439, %v1304
    %v1441 = vrot.slane %v1440, 4
    %v1442 = vadd.f32 %v1440, %v1441
    %v1443 = vrot.slane %v1442, 2
    %v1444 = vadd.f32 %v1442, %v1443
    %v1445 = vrot.slane %v1444, 1
    %v1446 = vadd.f32 %v1444, %v1445
    %v1447 = vadd.f32 %v1305, %v1306
    %v1448 = vadd.f32 %v1447, %v1307
    %v1449 = vadd.f32 %v1448, %v1308
    %v1450 = vadd.f32 %v1449, %v1309
    %v1451 = vadd.f32 %v1450, %v1310
    %v1452 = vadd.f32 %v1451, %v1311
    %v1453 = vadd.f32 %v1452, %v1312
    %v1454 = vadd.f32 %v1453, %v1313
    %v1455 = vadd.f32 %v1454, %v1314
    %v1456 = vadd.f32 %v1455, %v1315
    %v1457 = vadd.f32 %v1456, %v1316
    %v1458 = vadd.f32 %v1457, %v1317
    %v1459 = vadd.f32 %v1458, %v1318
    %v1460 = vadd.f32 %v1459, %v1319
    %v1461 = vadd.f32 %v1460, %v1320
    %v1462 = vrot.slane %v1461, 4
    %v1463 = vadd.f32 %v1461, %v1462
    %v1464 = vrot.slane %v1463, 2
    %v1465 = vadd.f32 %v1463, %v1464
    %v1466 = vrot.slane %v1465, 1
    %v1467 = vadd.f32 %v1465, %v1466
    %v1475 = vsel %vm880, %v1341, %v1065
    %v1476 = vsel %vm882, %v1362, %v1475
    %v1477 = vsel %vm884, %v1383, %v1476
    %v1478 = vsel %vm886, %v1404, %v1477
    %v1479 = vsel %vm888, %v1425, %v1478
    %v1480 = vsel %vm890, %v1446, %v1479
    %v1481 = vsel %vm892, %v1467, %v1480
    %s1483 = scalar_lea.vmem [#allocation5], 8
    %1484 = vst [vmem:[%s1483] sm:$0xff] %v1481
    %v1485 = vmul.f32 %v385, %v385
    %v1486 = vmul.f32 %v387, %v387
    %v1487 = vmul.f32 %v389, %v389
    %v1488 = vmul.f32 %v391, %v391
    %v1489 = vmul.f32 %v393, %v393
    %v1490 = vmul.f32 %v395, %v395
    %v1491 = vmul.f32 %v397, %v397
    %v1492 = vmul.f32 %v399, %v399
    %v1493 = vmul.f32 %v401, %v401
    %v1494 = vmul.f32 %v403, %v403
    %v1495 = vmul.f32 %v405, %v405
    %v1496 = vmul.f32 %v407, %v407
    %v1497 = vmul.f32 %v409, %v409
    %v1498 = vmul.f32 %v411, %v411
    %v1499 = vmul.f32 %v413, %v413
    %v1500 = vmul.f32 %v415, %v415
    %v1501 = vmul.f32 %v417, %v385
    %v1502 = vmul.f32 %v419, %v387
    %v1503 = vmul.f32 %v421, %v389
    %v1504 = vmul.f32 %v423, %v391
    %v1505 = vmul.f32 %v425, %v393
    %v1506 = vmul.f32 %v427, %v395
    %v1507 = vmul.f32 %v429, %v397
    %v1508 = vmul.f32 %v431, %v399
    %v1509 = vmul.f32 %v433, %v401
    %v1510 = vmul.f32 %v435, %v403
    %v1511 = vmul.f32 %v437, %v405
    %v1512 = vmul.f32 %v439, %v407
    %v1513 = vmul.f32 %v441, %v409
    %v1514 = vmul.f32 %v443, %v411
    %v1515 = vmul.f32 %v445, %v413
    %v1516 = vmul.f32 %v447, %v415
    %v1517 = vmul.f32 %v449, %v385
    %v1518 = vmul.f32 %v451, %v387
    %v1519 = vmul.f32 %v453, %v389
    %v1520 = vmul.f32 %v455, %v391
    %v1521 = vmul.f32 %v457, %v393
    %v1522 = vmul.f32 %v459, %v395
    %v1523 = vmul.f32 %v461, %v397
    %v1524 = vmul.f32 %v463, %v399
    %v1525 = vmul.f32 %v465, %v401
    %v1526 = vmul.f32 %v467, %v403
    %v1527 = vmul.f32 %v469, %v405
    %v1528 = vmul.f32 %v471, %v407
    %v1529 = vmul.f32 %v473, %v409
    %v1530 = vmul.f32 %v475, %v411
    %v1531 = vmul.f32 %v477, %v413
    %v1532 = vmul.f32 %v479, %v415
    %v1533 = vmul.f32 %v481, %v385
    %v1534 = vmul.f32 %v483, %v387
    %v1535 = vmul.f32 %v485, %v389
    %v1536 = vmul.f32 %v487, %v391
    %v1537 = vmul.f32 %v489, %v393
    %v1538 = vmul.f32 %v491, %v395
    %v1539 = vmul.f32 %v493, %v397
    %v1540 = vmul.f32 %v495, %v399
    %v1541 = vmul.f32 %v497, %v401
    %v1542 = vmul.f32 %v499, %v403
    %v1543 = vmul.f32 %v501, %v405
    %v1544 = vmul.f32 %v503, %v407
    %v1545 = vmul.f32 %v505, %v409
    %v1546 = vmul.f32 %v507, %v411
    %v1547 = vmul.f32 %v509, %v413
    %v1548 = vmul.f32 %v511, %v415
    %v1549 = vmul.f32 %v513, %v385
    %v1550 = vmul.f32 %v515, %v387
    %v1551 = vmul.f32 %v517, %v389
    %v1552 = vmul.f32 %v519, %v391
    %v1553 = vmul.f32 %v521, %v393
    %v1554 = vmul.f32 %v523, %v395
    %v1555 = vmul.f32 %v525, %v397
    %v1556 = vmul.f32 %v527, %v399
    %v1557 = vmul.f32 %v529, %v401
    %v1558 = vmul.f32 %v531, %v403
    %v1559 = vmul.f32 %v533, %v405
    %v1560 = vmul.f32 %v535, %v407
    %v1561 = vmul.f32 %v537, %v409
    %v1562 = vmul.f32 %v539, %v411
    %v1563 = vmul.f32 %v541, %v413
    %v1564 = vmul.f32 %v543, %v415
    %v1565 = vmul.f32 %v545, %v385
    %v1566 = vmul.f32 %v547, %v387
    %v1567 = vmul.f32 %v549, %v389
    %v1568 = vmul.f32 %v551, %v391
    %v1569 = vmul.f32 %v553, %v393
    %v1570 = vmul.f32 %v555, %v395
    %v1571 = vmul.f32 %v557, %v397
    %v1572 = vmul.f32 %v559, %v399
    %v1573 = vmul.f32 %v561, %v401
    %v1574 = vmul.f32 %v563, %v403
    %v1575 = vmul.f32 %v565, %v405
    %v1576 = vmul.f32 %v567, %v407
    %v1577 = vmul.f32 %v569, %v409
    %v1578 = vmul.f32 %v571, %v411
    %v1579 = vmul.f32 %v573, %v413
    %v1580 = vmul.f32 %v575, %v415
    %v1581 = vadd.f32 %v1485, %v1486
    %v1582 = vadd.f32 %v1581, %v1487
    %v1583 = vadd.f32 %v1582, %v1488
    %v1584 = vadd.f32 %v1583, %v1489
    %v1585 = vadd.f32 %v1584, %v1490
    %v1586 = vadd.f32 %v1585, %v1491
    %v1587 = vadd.f32 %v1586, %v1492
    %v1588 = vadd.f32 %v1587, %v1493
    %v1589 = vadd.f32 %v1588, %v1494
    %v1590 = vadd.f32 %v1589, %v1495
    %v1591 = vadd.f32 %v1590, %v1496
    %v1592 = vadd.f32 %v1591, %v1497
    %v1593 = vadd.f32 %v1592, %v1498
    %v1594 = vadd.f32 %v1593, %v1499
    %v1595 = vadd.f32 %v1594, %v1500
    %v1596 = vrot.slane %v1595, 4
    %v1597 = vadd.f32 %v1595, %v1596
    %v1598 = vrot.slane %v1597, 2
    %v1599 = vadd.f32 %v1597, %v1598
    %v1600 = vrot.slane %v1599, 1
    %v1601 = vadd.f32 %v1599, %v1600
    %v1602 = vadd.f32 %v1501, %v1502
    %v1603 = vadd.f32 %v1602, %v1503
    %v1604 = vadd.f32 %v1603, %v1504
    %v1605 = vadd.f32 %v1604, %v1505
    %v1606 = vadd.f32 %v1605, %v1506
    %v1607 = vadd.f32 %v1606, %v1507
    %v1608 = vadd.f32 %v1607, %v1508
    %v1609 = vadd.f32 %v1608, %v1509
    %v1610 = vadd.f32 %v1609, %v1510
    %v1611 = vadd.f32 %v1610, %v1511
    %v1612 = vadd.f32 %v1611, %v1512
    %v1613 = vadd.f32 %v1612, %v1513
    %v1614 = vadd.f32 %v1613, %v1514
    %v1615 = vadd.f32 %v1614, %v1515
    %v1616 = vadd.f32 %v1615, %v1516
    %v1617 = vrot.slane %v1616, 4
    %v1618 = vadd.f32 %v1616, %v1617
    %v1619 = vrot.slane %v1618, 2
    %v1620 = vadd.f32 %v1618, %v1619
    %v1621 = vrot.slane %v1620, 1
    %v1622 = vadd.f32 %v1620, %v1621
    %v1623 = vadd.f32 %v1517, %v1518
    %v1624 = vadd.f32 %v1623, %v1519
    %v1625 = vadd.f32 %v1624, %v1520
    %v1626 = vadd.f32 %v1625, %v1521
    %v1627 = vadd.f32 %v1626, %v1522
    %v1628 = vadd.f32 %v1627, %v1523
    %v1629 = vadd.f32 %v1628, %v1524
    %v1630 = vadd.f32 %v1629, %v1525
    %v1631 = vadd.f32 %v1630, %v1526
    %v1632 = vadd.f32 %v1631, %v1527
    %v1633 = vadd.f32 %v1632, %v1528
    %v1634 = vadd.f32 %v1633, %v1529
    %v1635 = vadd.f32 %v1634, %v1530
    %v1636 = vadd.f32 %v1635, %v1531
    %v1637 = vadd.f32 %v1636, %v1532
    %v1638 = vrot.slane %v1637, 4
    %v1639 = vadd.f32 %v1637, %v1638
    %v1640 = vrot.slane %v1639, 2
    %v1641 = vadd.f32 %v1639, %v1640
    %v1642 = vrot.slane %v1641, 1
    %v1643 = vadd.f32 %v1641, %v1642
    %v1644 = vadd.f32 %v1533, %v1534
    %v1645 = vadd.f32 %v1644, %v1535
    %v1646 = vadd.f32 %v1645, %v1536
    %v1647 = vadd.f32 %v1646, %v1537
    %v1648 = vadd.f32 %v1647, %v1538
    %v1649 = vadd.f32 %v1648, %v1539
    %v1650 = vadd.f32 %v1649, %v1540
    %v1651 = vadd.f32 %v1650, %v1541
    %v1652 = vadd.f32 %v1651, %v1542
    %v1653 = vadd.f32 %v1652, %v1543
    %v1654 = vadd.f32 %v1653, %v1544
    %v1655 = vadd.f32 %v1654, %v1545
    %v1656 = vadd.f32 %v1655, %v1546
    %v1657 = vadd.f32 %v1656, %v1547
    %v1658 = vadd.f32 %v1657, %v1548
    %v1659 = vrot.slane %v1658, 4
    %v1660 = vadd.f32 %v1658, %v1659
    %v1661 = vrot.slane %v1660, 2
    %v1662 = vadd.f32 %v1660, %v1661
    %v1663 = vrot.slane %v1662, 1
    %v1664 = vadd.f32 %v1662, %v1663
    %v1665 = vadd.f32 %v1549, %v1550
    %v1666 = vadd.f32 %v1665, %v1551
    %v1667 = vadd.f32 %v1666, %v1552
    %v1668 = vadd.f32 %v1667, %v1553
    %v1669 = vadd.f32 %v1668, %v1554
    %v1670 = vadd.f32 %v1669, %v1555
    %v1671 = vadd.f32 %v1670, %v1556
    %v1672 = vadd.f32 %v1671, %v1557
    %v1673 = vadd.f32 %v1672, %v1558
    %v1674 = vadd.f32 %v1673, %v1559
    %v1675 = vadd.f32 %v1674, %v1560
    %v1676 = vadd.f32 %v1675, %v1561
    %v1677 = vadd.f32 %v1676, %v1562
    %v1678 = vadd.f32 %v1677, %v1563
    %v1679 = vadd.f32 %v1678, %v1564
    %v1680 = vrot.slane %v1679, 4
    %v1681 = vadd.f32 %v1679, %v1680
    %v1682 = vrot.slane %v1681, 2
    %v1683 = vadd.f32 %v1681, %v1682
    %v1684 = vrot.slane %v1683, 1
    %v1685 = vadd.f32 %v1683, %v1684
    %v1686 = vadd.f32 %v1565, %v1566
    %v1687 = vadd.f32 %v1686, %v1567
    %v1688 = vadd.f32 %v1687, %v1568
    %v1689 = vadd.f32 %v1688, %v1569
    %v1690 = vadd.f32 %v1689, %v1570
    %v1691 = vadd.f32 %v1690, %v1571
    %v1692 = vadd.f32 %v1691, %v1572
    %v1693 = vadd.f32 %v1692, %v1573
    %v1694 = vadd.f32 %v1693, %v1574
    %v1695 = vadd.f32 %v1694, %v1575
    %v1696 = vadd.f32 %v1695, %v1576
    %v1697 = vadd.f32 %v1696, %v1577
    %v1698 = vadd.f32 %v1697, %v1578
    %v1699 = vadd.f32 %v1698, %v1579
    %v1700 = vadd.f32 %v1699, %v1580
    %v1701 = vrot.slane %v1700, 4
    %v1702 = vadd.f32 %v1700, %v1701
    %v1703 = vrot.slane %v1702, 2
    %v1704 = vadd.f32 %v1702, %v1703
    %v1705 = vrot.slane %v1704, 1
    %v1706 = vadd.f32 %v1704, %v1705
    %v1713 = vsel %vm880, %v1362, %v1086
    %v1714 = vsel %vm882, %v1601, %v1713
    %v1715 = vsel %vm884, %v1622, %v1714
    %v1716 = vsel %vm886, %v1643, %v1715
    %v1717 = vsel %vm888, %v1664, %v1716
    %v1718 = vsel %vm890, %v1685, %v1717
    %v1719 = vsel %vm892, %v1706, %v1718
    %s1721 = scalar_lea.vmem [#allocation5], 16
    %1722 = vst [vmem:[%s1721] sm:$0xff] %v1719
    %v1723 = vmul.f32 %v417, %v417
    %v1724 = vmul.f32 %v419, %v419
    %v1725 = vmul.f32 %v421, %v421
    %v1726 = vmul.f32 %v423, %v423
    %v1727 = vmul.f32 %v425, %v425
    %v1728 = vmul.f32 %v427, %v427
    %v1729 = vmul.f32 %v429, %v429
    %v1730 = vmul.f32 %v431, %v431
    %v1731 = vmul.f32 %v433, %v433
    %v1732 = vmul.f32 %v435, %v435
    %v1733 = vmul.f32 %v437, %v437
    %v1734 = vmul.f32 %v439, %v439
    %v1735 = vmul.f32 %v441, %v441
    %v1736 = vmul.f32 %v443, %v443
    %v1737 = vmul.f32 %v445, %v445
    %v1738 = vmul.f32 %v447, %v447
    %v1739 = vmul.f32 %v449, %v417
    %v1740 = vmul.f32 %v451, %v419
    %v1741 = vmul.f32 %v453, %v421
    %v1742 = vmul.f32 %v455, %v423
    %v1743 = vmul.f32 %v457, %v425
    %v1744 = vmul.f32 %v459, %v427
    %v1745 = vmul.f32 %v461, %v429
    %v1746 = vmul.f32 %v463, %v431
    %v1747 = vmul.f32 %v465, %v433
    %v1748 = vmul.f32 %v467, %v435
    %v1749 = vmul.f32 %v469, %v437
    %v1750 = vmul.f32 %v471, %v439
    %v1751 = vmul.f32 %v473, %v441
    %v1752 = vmul.f32 %v475, %v443
    %v1753 = vmul.f32 %v477, %v445
    %v1754 = vmul.f32 %v479, %v447
    %v1755 = vmul.f32 %v481, %v417
    %v1756 = vmul.f32 %v483, %v419
    %v1757 = vmul.f32 %v485, %v421
    %v1758 = vmul.f32 %v487, %v423
    %v1759 = vmul.f32 %v489, %v425
    %v1760 = vmul.f32 %v491, %v427
    %v1761 = vmul.f32 %v493, %v429
    %v1762 = vmul.f32 %v495, %v431
    %v1763 = vmul.f32 %v497, %v433
    %v1764 = vmul.f32 %v499, %v435
    %v1765 = vmul.f32 %v501, %v437
    %v1766 = vmul.f32 %v503, %v439
    %v1767 = vmul.f32 %v505, %v441
    %v1768 = vmul.f32 %v507, %v443
    %v1769 = vmul.f32 %v509, %v445
    %v1770 = vmul.f32 %v511, %v447
    %v1771 = vmul.f32 %v513, %v417
    %v1772 = vmul.f32 %v515, %v419
    %v1773 = vmul.f32 %v517, %v421
    %v1774 = vmul.f32 %v519, %v423
    %v1775 = vmul.f32 %v521, %v425
    %v1776 = vmul.f32 %v523, %v427
    %v1777 = vmul.f32 %v525, %v429
    %v1778 = vmul.f32 %v527, %v431
    %v1779 = vmul.f32 %v529, %v433
    %v1780 = vmul.f32 %v531, %v435
    %v1781 = vmul.f32 %v533, %v437
    %v1782 = vmul.f32 %v535, %v439
    %v1783 = vmul.f32 %v537, %v441
    %v1784 = vmul.f32 %v539, %v443
    %v1785 = vmul.f32 %v541, %v445
    %v1786 = vmul.f32 %v543, %v447
    %v1787 = vmul.f32 %v545, %v417
    %v1788 = vmul.f32 %v547, %v419
    %v1789 = vmul.f32 %v549, %v421
    %v1790 = vmul.f32 %v551, %v423
    %v1791 = vmul.f32 %v553, %v425
    %v1792 = vmul.f32 %v555, %v427
    %v1793 = vmul.f32 %v557, %v429
    %v1794 = vmul.f32 %v559, %v431
    %v1795 = vmul.f32 %v561, %v433
    %v1796 = vmul.f32 %v563, %v435
    %v1797 = vmul.f32 %v565, %v437
    %v1798 = vmul.f32 %v567, %v439
    %v1799 = vmul.f32 %v569, %v441
    %v1800 = vmul.f32 %v571, %v443
    %v1801 = vmul.f32 %v573, %v445
    %v1802 = vmul.f32 %v575, %v447
    %v1803 = vadd.f32 %v1723, %v1724
    %v1804 = vadd.f32 %v1803, %v1725
    %v1805 = vadd.f32 %v1804, %v1726
    %v1806 = vadd.f32 %v1805, %v1727
    %v1807 = vadd.f32 %v1806, %v1728
    %v1808 = vadd.f32 %v1807, %v1729
    %v1809 = vadd.f32 %v1808, %v1730
    %v1810 = vadd.f32 %v1809, %v1731
    %v1811 = vadd.f32 %v1810, %v1732
    %v1812 = vadd.f32 %v1811, %v1733
    %v1813 = vadd.f32 %v1812, %v1734
    %v1814 = vadd.f32 %v1813, %v1735
    %v1815 = vadd.f32 %v1814, %v1736
    %v1816 = vadd.f32 %v1815, %v1737
    %v1817 = vadd.f32 %v1816, %v1738
    %v1818 = vrot.slane %v1817, 4
    %v1819 = vadd.f32 %v1817, %v1818
    %v1820 = vrot.slane %v1819, 2
    %v1821 = vadd.f32 %v1819, %v1820
    %v1822 = vrot.slane %v1821, 1
    %v1823 = vadd.f32 %v1821, %v1822
    %v1824 = vadd.f32 %v1739, %v1740
    %v1825 = vadd.f32 %v1824, %v1741
    %v1826 = vadd.f32 %v1825, %v1742
    %v1827 = vadd.f32 %v1826, %v1743
    %v1828 = vadd.f32 %v1827, %v1744
    %v1829 = vadd.f32 %v1828, %v1745
    %v1830 = vadd.f32 %v1829, %v1746
    %v1831 = vadd.f32 %v1830, %v1747
    %v1832 = vadd.f32 %v1831, %v1748
    %v1833 = vadd.f32 %v1832, %v1749
    %v1834 = vadd.f32 %v1833, %v1750
    %v1835 = vadd.f32 %v1834, %v1751
    %v1836 = vadd.f32 %v1835, %v1752
    %v1837 = vadd.f32 %v1836, %v1753
    %v1838 = vadd.f32 %v1837, %v1754
    %v1839 = vrot.slane %v1838, 4
    %v1840 = vadd.f32 %v1838, %v1839
    %v1841 = vrot.slane %v1840, 2
    %v1842 = vadd.f32 %v1840, %v1841
    %v1843 = vrot.slane %v1842, 1
    %v1844 = vadd.f32 %v1842, %v1843
    %v1845 = vadd.f32 %v1755, %v1756
    %v1846 = vadd.f32 %v1845, %v1757
    %v1847 = vadd.f32 %v1846, %v1758
    %v1848 = vadd.f32 %v1847, %v1759
    %v1849 = vadd.f32 %v1848, %v1760
    %v1850 = vadd.f32 %v1849, %v1761
    %v1851 = vadd.f32 %v1850, %v1762
    %v1852 = vadd.f32 %v1851, %v1763
    %v1853 = vadd.f32 %v1852, %v1764
    %v1854 = vadd.f32 %v1853, %v1765
    %v1855 = vadd.f32 %v1854, %v1766
    %v1856 = vadd.f32 %v1855, %v1767
    %v1857 = vadd.f32 %v1856, %v1768
    %v1858 = vadd.f32 %v1857, %v1769
    %v1859 = vadd.f32 %v1858, %v1770
    %v1860 = vrot.slane %v1859, 4
    %v1861 = vadd.f32 %v1859, %v1860
    %v1862 = vrot.slane %v1861, 2
    %v1863 = vadd.f32 %v1861, %v1862
    %v1864 = vrot.slane %v1863, 1
    %v1865 = vadd.f32 %v1863, %v1864
    %v1866 = vadd.f32 %v1771, %v1772
    %v1867 = vadd.f32 %v1866, %v1773
    %v1868 = vadd.f32 %v1867, %v1774
    %v1869 = vadd.f32 %v1868, %v1775
    %v1870 = vadd.f32 %v1869, %v1776
    %v1871 = vadd.f32 %v1870, %v1777
    %v1872 = vadd.f32 %v1871, %v1778
    %v1873 = vadd.f32 %v1872, %v1779
    %v1874 = vadd.f32 %v1873, %v1780
    %v1875 = vadd.f32 %v1874, %v1781
    %v1876 = vadd.f32 %v1875, %v1782
    %v1877 = vadd.f32 %v1876, %v1783
    %v1878 = vadd.f32 %v1877, %v1784
    %v1879 = vadd.f32 %v1878, %v1785
    %v1880 = vadd.f32 %v1879, %v1786
    %v1881 = vrot.slane %v1880, 4
    %v1882 = vadd.f32 %v1880, %v1881
    %v1883 = vrot.slane %v1882, 2
    %v1884 = vadd.f32 %v1882, %v1883
    %v1885 = vrot.slane %v1884, 1
    %v1886 = vadd.f32 %v1884, %v1885
    %v1887 = vadd.f32 %v1787, %v1788
    %v1888 = vadd.f32 %v1887, %v1789
    %v1889 = vadd.f32 %v1888, %v1790
    %v1890 = vadd.f32 %v1889, %v1791
    %v1891 = vadd.f32 %v1890, %v1792
    %v1892 = vadd.f32 %v1891, %v1793
    %v1893 = vadd.f32 %v1892, %v1794
    %v1894 = vadd.f32 %v1893, %v1795
    %v1895 = vadd.f32 %v1894, %v1796
    %v1896 = vadd.f32 %v1895, %v1797
    %v1897 = vadd.f32 %v1896, %v1798
    %v1898 = vadd.f32 %v1897, %v1799
    %v1899 = vadd.f32 %v1898, %v1800
    %v1900 = vadd.f32 %v1899, %v1801
    %v1901 = vadd.f32 %v1900, %v1802
    %v1902 = vrot.slane %v1901, 4
    %v1903 = vadd.f32 %v1901, %v1902
    %v1904 = vrot.slane %v1903, 2
    %v1905 = vadd.f32 %v1903, %v1904
    %v1906 = vrot.slane %v1905, 1
    %v1907 = vadd.f32 %v1905, %v1906
    %v1913 = vsel %vm880, %v1383, %v1107
    %v1914 = vsel %vm882, %v1622, %v1913
    %v1915 = vsel %vm884, %v1823, %v1914
    %v1916 = vsel %vm886, %v1844, %v1915
    %v1917 = vsel %vm888, %v1865, %v1916
    %v1918 = vsel %vm890, %v1886, %v1917
    %v1919 = vsel %vm892, %v1907, %v1918
    %s1921 = scalar_lea.vmem [#allocation5], 24
    %1922 = vst [vmem:[%s1921] sm:$0xff] %v1919
    %v1923 = vmul.f32 %v449, %v449
    %v1924 = vmul.f32 %v451, %v451
    %v1925 = vmul.f32 %v453, %v453
    %v1926 = vmul.f32 %v455, %v455
    %v1927 = vmul.f32 %v457, %v457
    %v1928 = vmul.f32 %v459, %v459
    %v1929 = vmul.f32 %v461, %v461
    %v1930 = vmul.f32 %v463, %v463
    %v1931 = vmul.f32 %v465, %v465
    %v1932 = vmul.f32 %v467, %v467
    %v1933 = vmul.f32 %v469, %v469
    %v1934 = vmul.f32 %v471, %v471
    %v1935 = vmul.f32 %v473, %v473
    %v1936 = vmul.f32 %v475, %v475
    %v1937 = vmul.f32 %v477, %v477
    %v1938 = vmul.f32 %v479, %v479
    %v1939 = vmul.f32 %v481, %v449
    %v1940 = vmul.f32 %v483, %v451
    %v1941 = vmul.f32 %v485, %v453
    %v1942 = vmul.f32 %v487, %v455
    %v1943 = vmul.f32 %v489, %v457
    %v1944 = vmul.f32 %v491, %v459
    %v1945 = vmul.f32 %v493, %v461
    %v1946 = vmul.f32 %v495, %v463
    %v1947 = vmul.f32 %v497, %v465
    %v1948 = vmul.f32 %v499, %v467
    %v1949 = vmul.f32 %v501, %v469
    %v1950 = vmul.f32 %v503, %v471
    %v1951 = vmul.f32 %v505, %v473
    %v1952 = vmul.f32 %v507, %v475
    %v1953 = vmul.f32 %v509, %v477
    %v1954 = vmul.f32 %v511, %v479
    %v1955 = vmul.f32 %v513, %v449
    %v1956 = vmul.f32 %v515, %v451
    %v1957 = vmul.f32 %v517, %v453
    %v1958 = vmul.f32 %v519, %v455
    %v1959 = vmul.f32 %v521, %v457
    %v1960 = vmul.f32 %v523, %v459
    %v1961 = vmul.f32 %v525, %v461
    %v1962 = vmul.f32 %v527, %v463
    %v1963 = vmul.f32 %v529, %v465
    %v1964 = vmul.f32 %v531, %v467
    %v1965 = vmul.f32 %v533, %v469
    %v1966 = vmul.f32 %v535, %v471
    %v1967 = vmul.f32 %v537, %v473
    %v1968 = vmul.f32 %v539, %v475
    %v1969 = vmul.f32 %v541, %v477
    %v1970 = vmul.f32 %v543, %v479
    %v1971 = vmul.f32 %v545, %v449
    %v1972 = vmul.f32 %v547, %v451
    %v1973 = vmul.f32 %v549, %v453
    %v1974 = vmul.f32 %v551, %v455
    %v1975 = vmul.f32 %v553, %v457
    %v1976 = vmul.f32 %v555, %v459
    %v1977 = vmul.f32 %v557, %v461
    %v1978 = vmul.f32 %v559, %v463
    %v1979 = vmul.f32 %v561, %v465
    %v1980 = vmul.f32 %v563, %v467
    %v1981 = vmul.f32 %v565, %v469
    %v1982 = vmul.f32 %v567, %v471
    %v1983 = vmul.f32 %v569, %v473
    %v1984 = vmul.f32 %v571, %v475
    %v1985 = vmul.f32 %v573, %v477
    %v1986 = vmul.f32 %v575, %v479
    %v1987 = vadd.f32 %v1923, %v1924
    %v1988 = vadd.f32 %v1987, %v1925
    %v1989 = vadd.f32 %v1988, %v1926
    %v1990 = vadd.f32 %v1989, %v1927
    %v1991 = vadd.f32 %v1990, %v1928
    %v1992 = vadd.f32 %v1991, %v1929
    %v1993 = vadd.f32 %v1992, %v1930
    %v1994 = vadd.f32 %v1993, %v1931
    %v1995 = vadd.f32 %v1994, %v1932
    %v1996 = vadd.f32 %v1995, %v1933
    %v1997 = vadd.f32 %v1996, %v1934
    %v1998 = vadd.f32 %v1997, %v1935
    %v1999 = vadd.f32 %v1998, %v1936
    %v2000 = vadd.f32 %v1999, %v1937
    %v2001 = vadd.f32 %v2000, %v1938
    %v2002 = vrot.slane %v2001, 4
    %v2003 = vadd.f32 %v2001, %v2002
    %v2004 = vrot.slane %v2003, 2
    %v2005 = vadd.f32 %v2003, %v2004
    %v2006 = vrot.slane %v2005, 1
    %v2007 = vadd.f32 %v2005, %v2006
    %v2008 = vadd.f32 %v1939, %v1940
    %v2009 = vadd.f32 %v2008, %v1941
    %v2010 = vadd.f32 %v2009, %v1942
    %v2011 = vadd.f32 %v2010, %v1943
    %v2012 = vadd.f32 %v2011, %v1944
    %v2013 = vadd.f32 %v2012, %v1945
    %v2014 = vadd.f32 %v2013, %v1946
    %v2015 = vadd.f32 %v2014, %v1947
    %v2016 = vadd.f32 %v2015, %v1948
    %v2017 = vadd.f32 %v2016, %v1949
    %v2018 = vadd.f32 %v2017, %v1950
    %v2019 = vadd.f32 %v2018, %v1951
    %v2020 = vadd.f32 %v2019, %v1952
    %v2021 = vadd.f32 %v2020, %v1953
    %v2022 = vadd.f32 %v2021, %v1954
    %v2023 = vrot.slane %v2022, 4
    %v2024 = vadd.f32 %v2022, %v2023
    %v2025 = vrot.slane %v2024, 2
    %v2026 = vadd.f32 %v2024, %v2025
    %v2027 = vrot.slane %v2026, 1
    %v2028 = vadd.f32 %v2026, %v2027
    %v2029 = vadd.f32 %v1955, %v1956
    %v2030 = vadd.f32 %v2029, %v1957
    %v2031 = vadd.f32 %v2030, %v1958
    %v2032 = vadd.f32 %v2031, %v1959
    %v2033 = vadd.f32 %v2032, %v1960
    %v2034 = vadd.f32 %v2033, %v1961
    %v2035 = vadd.f32 %v2034, %v1962
    %v2036 = vadd.f32 %v2035, %v1963
    %v2037 = vadd.f32 %v2036, %v1964
    %v2038 = vadd.f32 %v2037, %v1965
    %v2039 = vadd.f32 %v2038, %v1966
    %v2040 = vadd.f32 %v2039, %v1967
    %v2041 = vadd.f32 %v2040, %v1968
    %v2042 = vadd.f32 %v2041, %v1969
    %v2043 = vadd.f32 %v2042, %v1970
    %v2044 = vrot.slane %v2043, 4
    %v2045 = vadd.f32 %v2043, %v2044
    %v2046 = vrot.slane %v2045, 2
    %v2047 = vadd.f32 %v2045, %v2046
    %v2048 = vrot.slane %v2047, 1
    %v2049 = vadd.f32 %v2047, %v2048
    %v2050 = vadd.f32 %v1971, %v1972
    %v2051 = vadd.f32 %v2050, %v1973
    %v2052 = vadd.f32 %v2051, %v1974
    %v2053 = vadd.f32 %v2052, %v1975
    %v2054 = vadd.f32 %v2053, %v1976
    %v2055 = vadd.f32 %v2054, %v1977
    %v2056 = vadd.f32 %v2055, %v1978
    %v2057 = vadd.f32 %v2056, %v1979
    %v2058 = vadd.f32 %v2057, %v1980
    %v2059 = vadd.f32 %v2058, %v1981
    %v2060 = vadd.f32 %v2059, %v1982
    %v2061 = vadd.f32 %v2060, %v1983
    %v2062 = vadd.f32 %v2061, %v1984
    %v2063 = vadd.f32 %v2062, %v1985
    %v2064 = vadd.f32 %v2063, %v1986
    %v2065 = vrot.slane %v2064, 4
    %v2066 = vadd.f32 %v2064, %v2065
    %v2067 = vrot.slane %v2066, 2
    %v2068 = vadd.f32 %v2066, %v2067
    %v2069 = vrot.slane %v2068, 1
    %v2070 = vadd.f32 %v2068, %v2069
    %v2075 = vsel %vm880, %v1404, %v1128
    %v2076 = vsel %vm882, %v1643, %v2075
    %v2077 = vsel %vm884, %v1844, %v2076
    %v2078 = vsel %vm886, %v2007, %v2077
    %v2079 = vsel %vm888, %v2028, %v2078
    %v2080 = vsel %vm890, %v2049, %v2079
    %v2081 = vsel %vm892, %v2070, %v2080
    %s2083 = scalar_lea.vmem [#allocation5], 32
    %2084 = vst [vmem:[%s2083] sm:$0xff] %v2081
    %v2085 = vmul.f32 %v481, %v481
    %v2086 = vmul.f32 %v483, %v483
    %v2087 = vmul.f32 %v485, %v485
    %v2088 = vmul.f32 %v487, %v487
    %v2089 = vmul.f32 %v489, %v489
    %v2090 = vmul.f32 %v491, %v491
    %v2091 = vmul.f32 %v493, %v493
    %v2092 = vmul.f32 %v495, %v495
    %v2093 = vmul.f32 %v497, %v497
    %v2094 = vmul.f32 %v499, %v499
    %v2095 = vmul.f32 %v501, %v501
    %v2096 = vmul.f32 %v503, %v503
    %v2097 = vmul.f32 %v505, %v505
    %v2098 = vmul.f32 %v507, %v507
    %v2099 = vmul.f32 %v509, %v509
    %v2100 = vmul.f32 %v511, %v511
    %v2101 = vmul.f32 %v513, %v481
    %v2102 = vmul.f32 %v515, %v483
    %v2103 = vmul.f32 %v517, %v485
    %v2104 = vmul.f32 %v519, %v487
    %v2105 = vmul.f32 %v521, %v489
    %v2106 = vmul.f32 %v523, %v491
    %v2107 = vmul.f32 %v525, %v493
    %v2108 = vmul.f32 %v527, %v495
    %v2109 = vmul.f32 %v529, %v497
    %v2110 = vmul.f32 %v531, %v499
    %v2111 = vmul.f32 %v533, %v501
    %v2112 = vmul.f32 %v535, %v503
    %v2113 = vmul.f32 %v537, %v505
    %v2114 = vmul.f32 %v539, %v507
    %v2115 = vmul.f32 %v541, %v509
    %v2116 = vmul.f32 %v543, %v511
    %v2117 = vmul.f32 %v545, %v481
    %v2118 = vmul.f32 %v547, %v483
    %v2119 = vmul.f32 %v549, %v485
    %v2120 = vmul.f32 %v551, %v487
    %v2121 = vmul.f32 %v553, %v489
    %v2122 = vmul.f32 %v555, %v491
    %v2123 = vmul.f32 %v557, %v493
    %v2124 = vmul.f32 %v559, %v495
    %v2125 = vmul.f32 %v561, %v497
    %v2126 = vmul.f32 %v563, %v499
    %v2127 = vmul.f32 %v565, %v501
    %v2128 = vmul.f32 %v567, %v503
    %v2129 = vmul.f32 %v569, %v505
    %v2130 = vmul.f32 %v571, %v507
    %v2131 = vmul.f32 %v573, %v509
    %v2132 = vmul.f32 %v575, %v511
    %v2133 = vadd.f32 %v2085, %v2086
    %v2134 = vadd.f32 %v2133, %v2087
    %v2135 = vadd.f32 %v2134, %v2088
    %v2136 = vadd.f32 %v2135, %v2089
    %v2137 = vadd.f32 %v2136, %v2090
    %v2138 = vadd.f32 %v2137, %v2091
    %v2139 = vadd.f32 %v2138, %v2092
    %v2140 = vadd.f32 %v2139, %v2093
    %v2141 = vadd.f32 %v2140, %v2094
    %v2142 = vadd.f32 %v2141, %v2095
    %v2143 = vadd.f32 %v2142, %v2096
    %v2144 = vadd.f32 %v2143, %v2097
    %v2145 = vadd.f32 %v2144, %v2098
    %v2146 = vadd.f32 %v2145, %v2099
    %v2147 = vadd.f32 %v2146, %v2100
    %v2148 = vrot.slane %v2147, 4
    %v2149 = vadd.f32 %v2147, %v2148
    %v2150 = vrot.slane %v2149, 2
    %v2151 = vadd.f32 %v2149, %v2150
    %v2152 = vrot.slane %v2151, 1
    %v2153 = vadd.f32 %v2151, %v2152
    %v2154 = vadd.f32 %v2101, %v2102
    %v2155 = vadd.f32 %v2154, %v2103
    %v2156 = vadd.f32 %v2155, %v2104
    %v2157 = vadd.f32 %v2156, %v2105
    %v2158 = vadd.f32 %v2157, %v2106
    %v2159 = vadd.f32 %v2158, %v2107
    %v2160 = vadd.f32 %v2159, %v2108
    %v2161 = vadd.f32 %v2160, %v2109
    %v2162 = vadd.f32 %v2161, %v2110
    %v2163 = vadd.f32 %v2162, %v2111
    %v2164 = vadd.f32 %v2163, %v2112
    %v2165 = vadd.f32 %v2164, %v2113
    %v2166 = vadd.f32 %v2165, %v2114
    %v2167 = vadd.f32 %v2166, %v2115
    %v2168 = vadd.f32 %v2167, %v2116
    %v2169 = vrot.slane %v2168, 4
    %v2170 = vadd.f32 %v2168, %v2169
    %v2171 = vrot.slane %v2170, 2
    %v2172 = vadd.f32 %v2170, %v2171
    %v2173 = vrot.slane %v2172, 1
    %v2174 = vadd.f32 %v2172, %v2173
    %v2175 = vadd.f32 %v2117, %v2118
    %v2176 = vadd.f32 %v2175, %v2119
    %v2177 = vadd.f32 %v2176, %v2120
    %v2178 = vadd.f32 %v2177, %v2121
    %v2179 = vadd.f32 %v2178, %v2122
    %v2180 = vadd.f32 %v2179, %v2123
    %v2181 = vadd.f32 %v2180, %v2124
    %v2182 = vadd.f32 %v2181, %v2125
    %v2183 = vadd.f32 %v2182, %v2126
    %v2184 = vadd.f32 %v2183, %v2127
    %v2185 = vadd.f32 %v2184, %v2128
    %v2186 = vadd.f32 %v2185, %v2129
    %v2187 = vadd.f32 %v2186, %v2130
    %v2188 = vadd.f32 %v2187, %v2131
    %v2189 = vadd.f32 %v2188, %v2132
    %v2190 = vrot.slane %v2189, 4
    %v2191 = vadd.f32 %v2189, %v2190
    %v2192 = vrot.slane %v2191, 2
    %v2193 = vadd.f32 %v2191, %v2192
    %v2194 = vrot.slane %v2193, 1
    %v2195 = vadd.f32 %v2193, %v2194
    %v2199 = vsel %vm880, %v1425, %v1149
    %v2200 = vsel %vm882, %v1664, %v2199
    %v2201 = vsel %vm884, %v1865, %v2200
    %v2202 = vsel %vm886, %v2028, %v2201
    %v2203 = vsel %vm888, %v2153, %v2202
    %v2204 = vsel %vm890, %v2174, %v2203
    %v2205 = vsel %vm892, %v2195, %v2204
    %s2207 = scalar_lea.vmem [#allocation5], 40
    %2208 = vst [vmem:[%s2207] sm:$0xff] %v2205
    %v2209 = vmul.f32 %v513, %v513
    %v2210 = vmul.f32 %v515, %v515
    %v2211 = vmul.f32 %v517, %v517
    %v2212 = vmul.f32 %v519, %v519
    %v2213 = vmul.f32 %v521, %v521
    %v2214 = vmul.f32 %v523, %v523
    %v2215 = vmul.f32 %v525, %v525
    %v2216 = vmul.f32 %v527, %v527
    %v2217 = vmul.f32 %v529, %v529
    %v2218 = vmul.f32 %v531, %v531
    %v2219 = vmul.f32 %v533, %v533
    %v2220 = vmul.f32 %v535, %v535
    %v2221 = vmul.f32 %v537, %v537
    %v2222 = vmul.f32 %v539, %v539
    %v2223 = vmul.f32 %v541, %v541
    %v2224 = vmul.f32 %v543, %v543
    %v2225 = vmul.f32 %v545, %v513
    %v2226 = vmul.f32 %v547, %v515
    %v2227 = vmul.f32 %v549, %v517
    %v2228 = vmul.f32 %v551, %v519
    %v2229 = vmul.f32 %v553, %v521
    %v2230 = vmul.f32 %v555, %v523
    %v2231 = vmul.f32 %v557, %v525
    %v2232 = vmul.f32 %v559, %v527
    %v2233 = vmul.f32 %v561, %v529
    %v2234 = vmul.f32 %v563, %v531
    %v2235 = vmul.f32 %v565, %v533
    %v2236 = vmul.f32 %v567, %v535
    %v2237 = vmul.f32 %v569, %v537
    %v2238 = vmul.f32 %v571, %v539
    %v2239 = vmul.f32 %v573, %v541
    %v2240 = vmul.f32 %v575, %v543
    %v2241 = vadd.f32 %v2209, %v2210
    %v2242 = vadd.f32 %v2241, %v2211
    %v2243 = vadd.f32 %v2242, %v2212
    %v2244 = vadd.f32 %v2243, %v2213
    %v2245 = vadd.f32 %v2244, %v2214
    %v2246 = vadd.f32 %v2245, %v2215
    %v2247 = vadd.f32 %v2246, %v2216
    %v2248 = vadd.f32 %v2247, %v2217
    %v2249 = vadd.f32 %v2248, %v2218
    %v2250 = vadd.f32 %v2249, %v2219
    %v2251 = vadd.f32 %v2250, %v2220
    %v2252 = vadd.f32 %v2251, %v2221
    %v2253 = vadd.f32 %v2252, %v2222
    %v2254 = vadd.f32 %v2253, %v2223
    %v2255 = vadd.f32 %v2254, %v2224
    %v2256 = vrot.slane %v2255, 4
    %v2257 = vadd.f32 %v2255, %v2256
    %v2258 = vrot.slane %v2257, 2
    %v2259 = vadd.f32 %v2257, %v2258
    %v2260 = vrot.slane %v2259, 1
    %v2261 = vadd.f32 %v2259, %v2260
    %v2262 = vadd.f32 %v2225, %v2226
    %v2263 = vadd.f32 %v2262, %v2227
    %v2264 = vadd.f32 %v2263, %v2228
    %v2265 = vadd.f32 %v2264, %v2229
    %v2266 = vadd.f32 %v2265, %v2230
    %v2267 = vadd.f32 %v2266, %v2231
    %v2268 = vadd.f32 %v2267, %v2232
    %v2269 = vadd.f32 %v2268, %v2233
    %v2270 = vadd.f32 %v2269, %v2234
    %v2271 = vadd.f32 %v2270, %v2235
    %v2272 = vadd.f32 %v2271, %v2236
    %v2273 = vadd.f32 %v2272, %v2237
    %v2274 = vadd.f32 %v2273, %v2238
    %v2275 = vadd.f32 %v2274, %v2239
    %v2276 = vadd.f32 %v2275, %v2240
    %v2277 = vrot.slane %v2276, 4
    %v2278 = vadd.f32 %v2276, %v2277
    %v2279 = vrot.slane %v2278, 2
    %v2280 = vadd.f32 %v2278, %v2279
    %v2281 = vrot.slane %v2280, 1
    %v2282 = vadd.f32 %v2280, %v2281
    %v2285 = vsel %vm880, %v1446, %v1170
    %v2286 = vsel %vm882, %v1685, %v2285
    %v2287 = vsel %vm884, %v1886, %v2286
    %v2288 = vsel %vm886, %v2049, %v2287
    %v2289 = vsel %vm888, %v2174, %v2288
    %v2290 = vsel %vm890, %v2261, %v2289
    %v2291 = vsel %vm892, %v2282, %v2290
    %s2293 = scalar_lea.vmem [#allocation5], 48
    %2294 = vst [vmem:[%s2293] sm:$0xff] %v2291
    %v2295 = vmul.f32 %v545, %v545
    %v2296 = vmul.f32 %v547, %v547
    %v2297 = vmul.f32 %v549, %v549
    %v2298 = vmul.f32 %v551, %v551
    %v2299 = vmul.f32 %v553, %v553
    %v2300 = vmul.f32 %v555, %v555
    %v2301 = vmul.f32 %v557, %v557
    %v2302 = vmul.f32 %v559, %v559
    %v2303 = vmul.f32 %v561, %v561
    %v2304 = vmul.f32 %v563, %v563
    %v2305 = vmul.f32 %v565, %v565
    %v2306 = vmul.f32 %v567, %v567
    %v2307 = vmul.f32 %v569, %v569
    %v2308 = vmul.f32 %v571, %v571
    %v2309 = vmul.f32 %v573, %v573
    %v2310 = vmul.f32 %v575, %v575
    %v2311 = vadd.f32 %v2295, %v2296
    %v2312 = vadd.f32 %v2311, %v2297
    %v2313 = vadd.f32 %v2312, %v2298
    %v2314 = vadd.f32 %v2313, %v2299
    %v2315 = vadd.f32 %v2314, %v2300
    %v2316 = vadd.f32 %v2315, %v2301
    %v2317 = vadd.f32 %v2316, %v2302
    %v2318 = vadd.f32 %v2317, %v2303
    %v2319 = vadd.f32 %v2318, %v2304
    %v2320 = vadd.f32 %v2319, %v2305
    %v2321 = vadd.f32 %v2320, %v2306
    %v2322 = vadd.f32 %v2321, %v2307
    %v2323 = vadd.f32 %v2322, %v2308
    %v2324 = vadd.f32 %v2323, %v2309
    %v2325 = vadd.f32 %v2324, %v2310
    %v2326 = vrot.slane %v2325, 4
    %v2327 = vadd.f32 %v2325, %v2326
    %v2328 = vrot.slane %v2327, 2
    %v2329 = vadd.f32 %v2327, %v2328
    %v2330 = vrot.slane %v2329, 1
    %v2331 = vadd.f32 %v2329, %v2330
    %v2333 = vsel %vm880, %v1467, %v1191
    %v2334 = vsel %vm882, %v1706, %v2333
    %v2335 = vsel %vm884, %v1907, %v2334
    %v2336 = vsel %vm886, %v2070, %v2335
    %v2337 = vsel %vm888, %v2195, %v2336
    %v2338 = vsel %vm890, %v2282, %v2337
    %v2339 = vsel %vm892, %v2331, %v2338
    %s2341 = scalar_lea.vmem [#allocation5], 56
    %2342 = vst [vmem:[%s2341] sm:$0xff] %v2339
    // Predicated region
    $region18: #{tpu_custom_call.1} parent=1 // pred_check
      _
    $region19: #{tpu_custom_call.1} parent=1 // pred_check_branch
      %2344 = sbr.rel (0) target = $region21
    $region20: #{tpu_custom_call.1} parent=1 // pred_region
      %2346 = vsyncadd [#allocation4], 0
      %s2347 = sshll.u32 [#allocation5], 4
      %s2348 = int_to_ptr.vmem [resolvable:$true] %s2347
      %s2349 = sshll.u32 %s3, 4
      %s2350 = int_to_ptr.hbm [resolvable:$true] %s2349
      %2355 = dma.vmem_to_hbm [thread:$0]  %s2348, 1024, %s2350, [#allocation4], 128, 128, 8
    $region21: #{tpu_custom_call.1} parent=1 // pred_fallthru
      _
    // Predicated region
    $region22: #{tpu_custom_call.1} parent=1 // pred_check
      _
    $region23: #{tpu_custom_call.1} parent=1 // pred_check_branch
      %2357 = sbr.rel (0) target = $region25
    $region24: #{tpu_custom_call.1} parent=1 // pred_region
      %2359 = vsyncadd [#allocation7], 0
      %s2361 = sshll.u32 [#allocation6], 4
      %s2362 = int_to_ptr.vmem [resolvable:$true] %s2361
      %s2363 = sshll.u32 %s4, 4
      %s2364 = int_to_ptr.hbm [resolvable:$true] %s2363
      %2366 = dma.vmem_to_hbm [thread:$0]  %s2362, 128, %s2364, [#allocation7]
    $region25: #{tpu_custom_call.1} parent=1 // pred_fallthru
      _
    // Predicated region
    $region26: #{tpu_custom_call.1} parent=1 // pred_check
      _
    $region27: #{tpu_custom_call.1} parent=1 // pred_check_branch
      %2368 = sbr.rel (0) target = $region29
    $region28: #{tpu_custom_call.1} parent=1 // pred_region
      %2370 = dma.done [#allocation4], 1024
    $region29: #{tpu_custom_call.1} parent=1 // pred_fallthru
      _
    // Predicated region
    $region30: #{tpu_custom_call.1} parent=1 // pred_check
      _
    $region31: #{tpu_custom_call.1} parent=1 // pred_check_branch
      %2372 = sbr.rel (0) target = $region33
    $region32: #{tpu_custom_call.1} parent=1 // pred_region
      %2374 = dma.done [#allocation7], 128
    $region33: #{tpu_custom_call.1} parent=1 // pred_fallthru
      _
    %2375 = vsyncpa [#allocation3], 1
    %2376 = vsyncpa [#allocation4], 1
    %2377 = vsyncpa [#allocation7], 1

</llo_original>
